<compile_context>
chip_gen: v5e
topology: v5e:2x2
jax: 0.10.0
libtpu: 0.0.40
codegen_flags: <defaults>
</compile_context>

<pallas_src>
import math
import jax
import jax.numpy as jnp
from jax.experimental import pallas as pl
from jax.experimental.pallas import tpu as pltpu

HIDDEN_SIZE = 50
INPUT_SIZE = 1
OUTPUT_SIZE = 1
NUM_LAYERS = 1  # single-layer LSTM, as in the module

LANE = 128      # pad each gate to a full 128-lane block
SUBLANE = 8     # pad batch to a sublane multiple


def _round_up(n, m):
    return (n + m - 1) // m * m


def _lstm_fc_kernel(x_ref, w_ih_ref, w_hh_ref, b_ref, w_fc_ref, b_fc_ref,
                    out_ref, xw_ref):
    # x_ref:    (T*Bp, I)    time-major input, flattened over (t, b)
    # w_ih_ref: (I, 4*Hp)    gate g occupies lanes [g*Hp, g*Hp+H), rest zero
    # w_hh_ref: (Hp, 4*Hp)   rows >= H and padded gate columns are zero
    # b_ref:    (1, 4*Hp)    b_ih + b_hh, padded lanes zero
    # w_fc_ref: (1, Hp)      fc weight row, padded lanes zero
    # b_fc_ref: (1, O)
    # out_ref:  (Bp, O)
    # xw_ref:   VMEM scratch (T*Bp, 4*Hp) holding the hoisted input projection
    TB = x_ref.shape[0]
    B = out_ref.shape[0]
    T = TB // B
    Hp = w_hh_ref.shape[0]

    # --- Hoisted input projection + fused bias (off the serial critical path) ---
    # I == 1: pure VPU broadcast multiply, keep the MXU free for the recurrence.
    if x_ref.shape[1] == 1:
        xw_ref[...] = x_ref[...] * w_ih_ref[...] + b_ref[...]
    else:
        xw_ref[...] = (
            jnp.dot(x_ref[...], w_ih_ref[...], preferred_element_type=jnp.float32)
            + b_ref[...]
        )

    # Loop-invariant loads hoisted out of the unrolled recurrence.
    w_hh = w_hh_ref[...]        # (Hp, 4*Hp) stays resident across all T steps
    w_fc = w_fc_ref[...]        # (1, Hp)
    b_fc = b_fc_ref[...]        # (1, O)

    def step(t, carry):
        h, c = carry
        row = pl.multiple_of(t * B, SUBLANE)
        g_x = xw_ref[pl.ds(row, B), :]                     # (B, 4*Hp), precomputed
        gates = g_x + jnp.dot(h, w_hh, preferred_element_type=jnp.float32)
        # 128-lane-aligned gate slices -> free vreg views (no XLU rotates)
        i = jax.nn.sigmoid(gates[:, 0 * Hp:1 * Hp])
        f = jax.nn.sigmoid(gates[:, 1 * Hp:2 * Hp])
        g = jnp.tanh(gates[:, 2 * Hp:3 * Hp])
        o = jax.nn.sigmoid(gates[:, 3 * Hp:4 * Hp])
        c_new = f * c + i * g
        h_new = o * jnp.tanh(c_new)
        return (h_new, c_new)

    h0 = jnp.zeros((B, Hp), jnp.float32)
    c0 = jnp.zeros((B, Hp), jnp.float32)
    # T is small and static: fully unroll so the LLO scheduler can interleave the MXU
    # matmul of step t with the EUP/VPU epilogue of step t-1.
    h_T, _ = jax.lax.fori_loop(0, T, step, (h0, c0), unroll=True)

    # FC with O == 1: broadcast multiply + lane reduction (no N=1 MXU matmul).
    out_ref[...] = jnp.sum(h_T * w_fc, axis=-1, keepdims=True) + b_fc


def lstm_model_forward(x, params):
    """x: (B, T, I) batch-first float32, matching the PyTorch module's input."""
    B, T, I = x.shape
    H = params["w_hh"].shape[1]   # w_hh: (4H, H)
    O = params["w_fc"].shape[0]   # w_fc: (O, H)
    Hp = _round_up(H, LANE)
    Bp = _round_up(B, SUBLANE)

    x = x.astype(jnp.float32)
    x_tm = jnp.transpose(x, (1, 0, 2))                       # (T, B, I) time-major
    x_tm = jnp.pad(x_tm, ((0, 0), (0, Bp - B), (0, 0)))      # pad batch to sublanes
    x_flat = x_tm.reshape(T * Bp, I)                         # (T*Bp, I)

    def pad_gate_cols(w_t):
        # (K, 4H) -> (K, 4*Hp): gate g moved to lanes [g*Hp, g*Hp+H), rest zero
        K = w_t.shape[0]
        out = jnp.zeros((K, 4 * Hp), jnp.float32)
        for g in range(4):
            out = out.at[:, g * Hp: g * Hp + H].set(w_t[:, g * H:(g + 1) * H])
        return out

    w_ih_p = pad_gate_cols(params["w_ih"].T.astype(jnp.float32))              # (I, 4*Hp)
    w_hh_p = pad_gate_cols(params["w_hh"].T.astype(jnp.float32))              # (H, 4*Hp)
    w_hh_p = jnp.pad(w_hh_p, ((0, Hp - H), (0, 0)))                           # (Hp, 4*Hp)
    b_p = pad_gate_cols(
        (params["b_ih"] + params["b_hh"]).reshape(1, -1).astype(jnp.float32)  # (1, 4*Hp)
    )
    w_fc_p = jnp.pad(params["w_fc"].astype(jnp.float32), ((0, 0), (0, Hp - H)))  # (O, Hp)
    b_fc = params["b_fc"].reshape(1, -1).astype(jnp.float32)                  # (1, O)

    # TODO(synk): for long T / large B, switch to a T-chunked grid ("arbitrary" axis) with
    # h/c held in persistent VMEM scratch to bound VMEM on v7x; unnecessary at T=8, B=2.
    vmem = pl.BlockSpec(memory_space=pltpu.MemorySpace.VMEM)
    out_p = pl.pallas_call(
        _lstm_fc_kernel,
        out_shape=jax.ShapeDtypeStruct((Bp, O), jnp.float32),
        in_specs=[vmem] * 6,
        out_specs=vmem,
        scratch_shapes=[pltpu.VMEM((T * Bp, 4 * Hp), jnp.float32)],
    )(x_flat, w_ih_p, w_hh_p, b_p, w_fc_p, b_fc)
    return out_p[:B]


def lstm_model_reference(x, params):
    """Pure-JAX reference mirroring torch.nn.LSTM + Linear forward."""
    B, T, I = x.shape
    H = params["w_hh"].shape[1]
    w_ih_t = params["w_ih"].T
    w_hh_t = params["w_hh"].T
    b = params["b_ih"] + params["b_hh"]

    def step(carry, x_t):
        h, c = carry
        gates = x_t @ w_ih_t + h @ w_hh_t + b
        i = jax.nn.sigmoid(gates[:, 0 * H:1 * H])
        f = jax.nn.sigmoid(gates[:, 1 * H:2 * H])
        g = jnp.tanh(gates[:, 2 * H:3 * H])
        o = jax.nn.sigmoid(gates[:, 3 * H:4 * H])
        c = f * c + i * g
        h = o * jnp.tanh(c)
        return (h, c), None

    h0 = jnp.zeros((B, H), jnp.float32)
    c0 = jnp.zeros((B, H), jnp.float32)
    (h_T, _), _ = jax.lax.scan(step, (h0, c0), jnp.transpose(x, (1, 0, 2)))
    return h_T @ params["w_fc"].T + params["b_fc"]


def init_params(key, input_size, hidden_size, output_size):
    """Deterministic init matching PyTorch's U(-1/sqrt(H), 1/sqrt(H)) convention."""
    stdv = 1.0 / math.sqrt(hidden_size)
    ks = jax.random.split(key, 6)
    u = lambda k, shape: jax.random.uniform(k, shape, jnp.float32, -stdv, stdv)
    return {
        "w_ih": u(ks[0], (4 * hidden_size, input_size)),
        "w_hh": u(ks[1], (4 * hidden_size, hidden_size)),
        "b_ih": u(ks[2], (4 * hidden_size,)),
        "b_hh": u(ks[3], (4 * hidden_size,)),
        "w_fc": u(ks[4], (output_size, hidden_size)),
        "b_fc": u(ks[5], (output_size,)),
    }


if __name__ == "__main__":
    key = jax.random.PRNGKey(0)
    k_x, k_p = jax.random.split(key)

    B, T = 2, 8  # small batch / sequence length
    x = jax.random.normal(k_x, (B, T, INPUT_SIZE), jnp.float32)
    params = init_params(k_p, INPUT_SIZE, HIDDEN_SIZE, OUTPUT_SIZE)

    out = lstm_model_forward(x, params)
    out = jax.block_until_ready(out)

    ref = lstm_model_reference(x, params)
    assert out.shape == (B, OUTPUT_SIZE)
    assert jnp.allclose(out, ref, atol=1e-5, rtol=1e-5), (out, ref)

    print("KERNEL_OK")
</pallas_src>

<mosaic_0001>
module attributes {stable_mosaic.version = 11 : i64} {
  func.func @_lstm_fc_kernel(%arg0: memref<64x1xf32, #tpu.memory_space<vmem>>, %arg1: memref<1x512xf32, #tpu.memory_space<vmem>>, %arg2: memref<128x512xf32, #tpu.memory_space<vmem>>, %arg3: memref<1x512xf32, #tpu.memory_space<vmem>>, %arg4: memref<1x128xf32, #tpu.memory_space<vmem>>, %arg5: memref<1x1xf32, #tpu.memory_space<vmem>>, %arg6: memref<8x1xf32, #tpu.memory_space<vmem>>, %arg7: memref<64x512xf32, #tpu.memory_space<vmem>>) attributes {dimension_semantics = [], scalar_prefetch = 0 : i64, scratch_operands = 1 : i64, tpu.core_type = #tpu.core_type<tc>} {
    %c0 = arith.constant 0 : index
    %c0_0 = arith.constant 0 : index
    %0 = vector.load %arg0[%c0, %c0_0] : memref<64x1xf32, #tpu.memory_space<vmem>>, vector<64x1xf32>
    %c0_1 = arith.constant 0 : index
    %c0_2 = arith.constant 0 : index
    %1 = vector.load %arg1[%c0_1, %c0_2] : memref<1x512xf32, #tpu.memory_space<vmem>>, vector<1x512xf32>
    %2 = vector.broadcast %0 : vector<64x1xf32> to vector<64x512xf32>
    %3 = vector.broadcast %1 : vector<1x512xf32> to vector<64x512xf32>
    %4 = arith.mulf %2, %3 : vector<64x512xf32>
    %c0_3 = arith.constant 0 : index
    %c0_4 = arith.constant 0 : index
    %5 = vector.load %arg3[%c0_3, %c0_4] : memref<1x512xf32, #tpu.memory_space<vmem>>, vector<1x512xf32>
    %6 = vector.broadcast %5 : vector<1x512xf32> to vector<64x512xf32>
    %7 = arith.addf %4, %6 : vector<64x512xf32>
    %c0_5 = arith.constant 0 : index
    %c0_6 = arith.constant 0 : index
    %8 = vector.load %arg7[%c0_5, %c0_6] : memref<64x512xf32, #tpu.memory_space<vmem>>, vector<64x512xf32>
    tpu.vector_store %arg7[%c0_5, %c0_6], %7 {strides = array<i32>} : memref<64x512xf32, #tpu.memory_space<vmem>>, vector<64x512xf32>,
    %c0_7 = arith.constant 0 : index
    %c0_8 = arith.constant 0 : index
    %9 = vector.load %arg2[%c0_7, %c0_8] : memref<128x512xf32, #tpu.memory_space<vmem>>, vector<128x512xf32>
    %c0_9 = arith.constant 0 : index
    %c0_10 = arith.constant 0 : index
    %10 = vector.load %arg4[%c0_9, %c0_10] : memref<1x128xf32, #tpu.memory_space<vmem>>, vector<1x128xf32>
    %c0_11 = arith.constant 0 : index
    %c0_12 = arith.constant 0 : index
    %11 = vector.load %arg5[%c0_11, %c0_12] : memref<1x1xf32, #tpu.memory_space<vmem>>, vector<1x1xf32>
    %cst = arith.constant 0.000000e+00 : f32
    %12 = vector.broadcast %cst : f32 to vector<8x128xf32>
    %cst_13 = arith.constant 0.000000e+00 : f32
    %13 = vector.broadcast %cst_13 : f32 to vector<8x128xf32>
    %c0_i32 = arith.constant 0 : i32
    %c8_i32 = arith.constant 8 : i32
    %14 = arith.muli %c0_i32, %c8_i32 : i32
    %15 = tpu.assume_multiple %14, 8 : i32
    %16 = arith.index_cast %15 : i32 to index
    %c0_14 = arith.constant 0 : index
    %17 = vector.load %arg7[%16, %c0_14] : memref<64x512xf32, #tpu.memory_space<vmem>>, vector<8x512xf32>
    %cst_15 = arith.constant dense<0.000000e+00> : vector<8x512xf32>
    %18 = tpu.matmul %12, %9, %cst_15 {dimension_numbers = #tpu.dot_dimension_numbers<[1], [0], [0], [1], [0, 0, 1, 1], [], []>} : vector<8x128xf32>, vector<128x512xf32>, vector<8x512xf32> -> vector<8x512xf32>
    %19 = arith.addf %17, %18 : vector<8x512xf32>
    %20 = vector.extract_strided_slice %19 {offsets = [0, 0], sizes = [8, 128], strides = [1, 1]} : vector<8x512xf32> to vector<8x128xf32>
    %21 = arith.negf %20 : vector<8x128xf32>
    %22 = math.exp %21 : vector<8x128xf32>
    %cst_16 = arith.constant 1.000000e+00 : f32
    %23 = vector.broadcast %cst_16 : f32 to vector<8x128xf32>
    %24 = arith.addf %23, %22 : vector<8x128xf32>
    %25 = arith.divf %23, %24 : vector<8x128xf32>
    %26 = vector.extract_strided_slice %19 {offsets = [0, 128], sizes = [8, 128], strides = [1, 1]} : vector<8x512xf32> to vector<8x128xf32>
    %27 = arith.negf %26 : vector<8x128xf32>
    %28 = math.exp %27 : vector<8x128xf32>
    %cst_17 = arith.constant 1.000000e+00 : f32
    %29 = vector.broadcast %cst_17 : f32 to vector<8x128xf32>
    %30 = arith.addf %29, %28 : vector<8x128xf32>
    %31 = arith.divf %29, %30 : vector<8x128xf32>
    %32 = vector.extract_strided_slice %19 {offsets = [0, 256], sizes = [8, 128], strides = [1, 1]} : vector<8x512xf32> to vector<8x128xf32>
    %33 = math.tanh %32 : vector<8x128xf32>
    %34 = vector.extract_strided_slice %19 {offsets = [0, 384], sizes = [8, 128], strides = [1, 1]} : vector<8x512xf32> to vector<8x128xf32>
    %35 = arith.negf %34 : vector<8x128xf32>
    %36 = math.exp %35 : vector<8x128xf32>
    %cst_18 = arith.constant 1.000000e+00 : f32
    %37 = vector.broadcast %cst_18 : f32 to vector<8x128xf32>
    %38 = arith.addf %37, %36 : vector<8x128xf32>
    %39 = arith.divf %37, %38 : vector<8x128xf32>
    %40 = arith.mulf %31, %13 : vector<8x128xf32>
    %41 = arith.mulf %25, %33 : vector<8x128xf32>
    %42 = arith.addf %40, %41 : vector<8x128xf32>
    %43 = math.tanh %42 : vector<8x128xf32>
    %44 = arith.mulf %39, %43 : vector<8x128xf32>
    %c1_i32 = arith.constant 1 : i32
    %c8_i32_19 = arith.constant 8 : i32
    %45 = arith.muli %c1_i32, %c8_i32_19 : i32
    %46 = tpu.assume_multiple %45, 8 : i32
    %47 = arith.index_cast %46 : i32 to index
    %c0_20 = arith.constant 0 : index
    %48 = vector.load %arg7[%47, %c0_20] : memref<64x512xf32, #tpu.memory_space<vmem>>, vector<8x512xf32>
    %cst_21 = arith.constant dense<0.000000e+00> : vector<8x512xf32>
    %49 = tpu.matmul %44, %9, %cst_21 {dimension_numbers = #tpu.dot_dimension_numbers<[1], [0], [0], [1], [0, 0, 1, 1], [], []>} : vector<8x128xf32>, vector<128x512xf32>, vector<8x512xf32> -> vector<8x512xf32>
    %50 = arith.addf %48, %49 : vector<8x512xf32>
    %51 = vector.extract_strided_slice %50 {offsets = [0, 0], sizes = [8, 128], strides = [1, 1]} : vector<8x512xf32> to vector<8x128xf32>
    %52 = arith.negf %51 : vector<8x128xf32>
    %53 = math.exp %52 : vector<8x128xf32>
    %cst_22 = arith.constant 1.000000e+00 : f32
    %54 = vector.broadcast %cst_22 : f32 to vector<8x128xf32>
    %55 = arith.addf %54, %53 : vector<8x128xf32>
    %56 = arith.divf %54, %55 : vector<8x128xf32>
    %57 = vector.extract_strided_slice %50 {offsets = [0, 128], sizes = [8, 128], strides = [1, 1]} : vector<8x512xf32> to vector<8x128xf32>
    %58 = arith.negf %57 : vector<8x128xf32>
    %59 = math.exp %58 : vector<8x128xf32>
    %cst_23 = arith.constant 1.000000e+00 : f32
    %60 = vector.broadcast %cst_23 : f32 to vector<8x128xf32>
    %61 = arith.addf %60, %59 : vector<8x128xf32>
    %62 = arith.divf %60, %61 : vector<8x128xf32>
    %63 = vector.extract_strided_slice %50 {offsets = [0, 256], sizes = [8, 128], strides = [1, 1]} : vector<8x512xf32> to vector<8x128xf32>
    %64 = math.tanh %63 : vector<8x128xf32>
    %65 = vector.extract_strided_slice %50 {offsets = [0, 384], sizes = [8, 128], strides = [1, 1]} : vector<8x512xf32> to vector<8x128xf32>
    %66 = arith.negf %65 : vector<8x128xf32>
    %67 = math.exp %66 : vector<8x128xf32>
    %cst_24 = arith.constant 1.000000e+00 : f32
    %68 = vector.broadcast %cst_24 : f32 to vector<8x128xf32>
    %69 = arith.addf %68, %67 : vector<8x128xf32>
    %70 = arith.divf %68, %69 : vector<8x128xf32>
    %71 = arith.mulf %62, %42 : vector<8x128xf32>
    %72 = arith.mulf %56, %64 : vector<8x128xf32>
    %73 = arith.addf %71, %72 : vector<8x128xf32>
    %74 = math.tanh %73 : vector<8x128xf32>
    %75 = arith.mulf %70, %74 : vector<8x128xf32>
    %c2_i32 = arith.constant 2 : i32
    %c8_i32_25 = arith.constant 8 : i32
    %76 = arith.muli %c2_i32, %c8_i32_25 : i32
    %77 = tpu.assume_multiple %76, 8 : i32
    %78 = arith.index_cast %77 : i32 to index
    %c0_26 = arith.constant 0 : index
    %79 = vector.load %arg7[%78, %c0_26] : memref<64x512xf32, #tpu.memory_space<vmem>>, vector<8x512xf32>
    %cst_27 = arith.constant dense<0.000000e+00> : vector<8x512xf32>
    %80 = tpu.matmul %75, %9, %cst_27 {dimension_numbers = #tpu.dot_dimension_numbers<[1], [0], [0], [1], [0, 0, 1, 1], [], []>} : vector<8x128xf32>, vector<128x512xf32>, vector<8x512xf32> -> vector<8x512xf32>
    %81 = arith.addf %79, %80 : vector<8x512xf32>
    %82 = vector.extract_strided_slice %81 {offsets = [0, 0], sizes = [8, 128], strides = [1, 1]} : vector<8x512xf32> to vector<8x128xf32>
    %83 = arith.negf %82 : vector<8x128xf32>
    %84 = math.exp %83 : vector<8x128xf32>
    %cst_28 = arith.constant 1.000000e+00 : f32
    %85 = vector.broadcast %cst_28 : f32 to vector<8x128xf32>
    %86 = arith.addf %85, %84 : vector<8x128xf32>
    %87 = arith.divf %85, %86 : vector<8x128xf32>
    %88 = vector.extract_strided_slice %81 {offsets = [0, 128], sizes = [8, 128], strides = [1, 1]} : vector<8x512xf32> to vector<8x128xf32>
    %89 = arith.negf %88 : vector<8x128xf32>
    %90 = math.exp %89 : vector<8x128xf32>
    %cst_29 = arith.constant 1.000000e+00 : f32
    %91 = vector.broadcast %cst_29 : f32 to vector<8x128xf32>
    %92 = arith.addf %91, %90 : vector<8x128xf32>
    %93 = arith.divf %91, %92 : vector<8x128xf32>
    %94 = vector.extract_strided_slice %81 {offsets = [0, 256], sizes = [8, 128], strides = [1, 1]} : vector<8x512xf32> to vector<8x128xf32>
    %95 = math.tanh %94 : vector<8x128xf32>
    %96 = vector.extract_strided_slice %81 {offsets = [0, 384], sizes = [8, 128], strides = [1, 1]} : vector<8x512xf32> to vector<8x128xf32>
    %97 = arith.negf %96 : vector<8x128xf32>
    %98 = math.exp %97 : vector<8x128xf32>
    %cst_30 = arith.constant 1.000000e+00 : f32
    %99 = vector.broadcast %cst_30 : f32 to vector<8x128xf32>
    %100 = arith.addf %99, %98 : vector<8x128xf32>
    %101 = arith.divf %99, %100 : vector<8x128xf32>
    %102 = arith.mulf %93, %73 : vector<8x128xf32>
    %103 = arith.mulf %87, %95 : vector<8x128xf32>
    %104 = arith.addf %102, %103 : vector<8x128xf32>
    %105 = math.tanh %104 : vector<8x128xf32>
    %106 = arith.mulf %101, %105 : vector<8x128xf32>
    %c3_i32 = arith.constant 3 : i32
    %c8_i32_31 = arith.constant 8 : i32
    %107 = arith.muli %c3_i32, %c8_i32_31 : i32
    %108 = tpu.assume_multiple %107, 8 : i32
    %109 = arith.index_cast %108 : i32 to index
    %c0_32 = arith.constant 0 : index
    %110 = vector.load %arg7[%109, %c0_32] : memref<64x512xf32, #tpu.memory_space<vmem>>, vector<8x512xf32>
    %cst_33 = arith.constant dense<0.000000e+00> : vector<8x512xf32>
    %111 = tpu.matmul %106, %9, %cst_33 {dimension_numbers = #tpu.dot_dimension_numbers<[1], [0], [0], [1], [0, 0, 1, 1], [], []>} : vector<8x128xf32>, vector<128x512xf32>, vector<8x512xf32> -> vector<8x512xf32>
    %112 = arith.addf %110, %111 : vector<8x512xf32>
    %113 = vector.extract_strided_slice %112 {offsets = [0, 0], sizes = [8, 128], strides = [1, 1]} : vector<8x512xf32> to vector<8x128xf32>
    %114 = arith.negf %113 : vector<8x128xf32>
    %115 = math.exp %114 : vector<8x128xf32>
    %cst_34 = arith.constant 1.000000e+00 : f32
    %116 = vector.broadcast %cst_34 : f32 to vector<8x128xf32>
    %117 = arith.addf %116, %115 : vector<8x128xf32>
    %118 = arith.divf %116, %117 : vector<8x128xf32>
    %119 = vector.extract_strided_slice %112 {offsets = [0, 128], sizes = [8, 128], strides = [1, 1]} : vector<8x512xf32> to vector<8x128xf32>
    %120 = arith.negf %119 : vector<8x128xf32>
    %121 = math.exp %120 : vector<8x128xf32>
    %cst_35 = arith.constant 1.000000e+00 : f32
    %122 = vector.broadcast %cst_35 : f32 to vector<8x128xf32>
    %123 = arith.addf %122, %121 : vector<8x128xf32>
    %124 = arith.divf %122, %123 : vector<8x128xf32>
    %125 = vector.extract_strided_slice %112 {offsets = [0, 256], sizes = [8, 128], strides = [1, 1]} : vector<8x512xf32> to vector<8x128xf32>
    %126 = math.tanh %125 : vector<8x128xf32>
    %127 = vector.extract_strided_slice %112 {offsets = [0, 384], sizes = [8, 128], strides = [1, 1]} : vector<8x512xf32> to vector<8x128xf32>
    %128 = arith.negf %127 : vector<8x128xf32>
    %129 = math.exp %128 : vector<8x128xf32>
    %cst_36 = arith.constant 1.000000e+00 : f32
    %130 = vector.broadcast %cst_36 : f32 to vector<8x128xf32>
    %131 = arith.addf %130, %129 : vector<8x128xf32>
    %132 = arith.divf %130, %131 : vector<8x128xf32>
    %133 = arith.mulf %124, %104 : vector<8x128xf32>
    %134 = arith.mulf %118, %126 : vector<8x128xf32>
    %135 = arith.addf %133, %134 : vector<8x128xf32>
    %136 = math.tanh %135 : vector<8x128xf32>
    %137 = arith.mulf %132, %136 : vector<8x128xf32>
    %c4_i32 = arith.constant 4 : i32
    %c8_i32_37 = arith.constant 8 : i32
    %138 = arith.muli %c4_i32, %c8_i32_37 : i32
    %139 = tpu.assume_multiple %138, 8 : i32
    %140 = arith.index_cast %139 : i32 to index
    %c0_38 = arith.constant 0 : index
    %141 = vector.load %arg7[%140, %c0_38] : memref<64x512xf32, #tpu.memory_space<vmem>>, vector<8x512xf32>
    %cst_39 = arith.constant dense<0.000000e+00> : vector<8x512xf32>
    %142 = tpu.matmul %137, %9, %cst_39 {dimension_numbers = #tpu.dot_dimension_numbers<[1], [0], [0], [1], [0, 0, 1, 1], [], []>} : vector<8x128xf32>, vector<128x512xf32>, vector<8x512xf32> -> vector<8x512xf32>
    %143 = arith.addf %141, %142 : vector<8x512xf32>
    %144 = vector.extract_strided_slice %143 {offsets = [0, 0], sizes = [8, 128], strides = [1, 1]} : vector<8x512xf32> to vector<8x128xf32>
    %145 = arith.negf %144 : vector<8x128xf32>
    %146 = math.exp %145 : vector<8x128xf32>
    %cst_40 = arith.constant 1.000000e+00 : f32
    %147 = vector.broadcast %cst_40 : f32 to vector<8x128xf32>
    %148 = arith.addf %147, %146 : vector<8x128xf32>
    %149 = arith.divf %147, %148 : vector<8x128xf32>
    %150 = vector.extract_strided_slice %143 {offsets = [0, 128], sizes = [8, 128], strides = [1, 1]} : vector<8x512xf32> to vector<8x128xf32>
    %151 = arith.negf %150 : vector<8x128xf32>
    %152 = math.exp %151 : vector<8x128xf32>
    %cst_41 = arith.constant 1.000000e+00 : f32
    %153 = vector.broadcast %cst_41 : f32 to vector<8x128xf32>
    %154 = arith.addf %153, %152 : vector<8x128xf32>
    %155 = arith.divf %153, %154 : vector<8x128xf32>
    %156 = vector.extract_strided_slice %143 {offsets = [0, 256], sizes = [8, 128], strides = [1, 1]} : vector<8x512xf32> to vector<8x128xf32>
    %157 = math.tanh %156 : vector<8x128xf32>
    %158 = vector.extract_strided_slice %143 {offsets = [0, 384], sizes = [8, 128], strides = [1, 1]} : vector<8x512xf32> to vector<8x128xf32>
    %159 = arith.negf %158 : vector<8x128xf32>
    %160 = math.exp %159 : vector<8x128xf32>
    %cst_42 = arith.constant 1.000000e+00 : f32
    %161 = vector.broadcast %cst_42 : f32 to vector<8x128xf32>
    %162 = arith.addf %161, %160 : vector<8x128xf32>
    %163 = arith.divf %161, %162 : vector<8x128xf32>
    %164 = arith.mulf %155, %135 : vector<8x128xf32>
    %165 = arith.mulf %149, %157 : vector<8x128xf32>
    %166 = arith.addf %164, %165 : vector<8x128xf32>
    %167 = math.tanh %166 : vector<8x128xf32>
    %168 = arith.mulf %163, %167 : vector<8x128xf32>
    %c5_i32 = arith.constant 5 : i32
    %c8_i32_43 = arith.constant 8 : i32
    %169 = arith.muli %c5_i32, %c8_i32_43 : i32
    %170 = tpu.assume_multiple %169, 8 : i32
    %171 = arith.index_cast %170 : i32 to index
    %c0_44 = arith.constant 0 : index
    %172 = vector.load %arg7[%171, %c0_44] : memref<64x512xf32, #tpu.memory_space<vmem>>, vector<8x512xf32>
    %cst_45 = arith.constant dense<0.000000e+00> : vector<8x512xf32>
    %173 = tpu.matmul %168, %9, %cst_45 {dimension_numbers = #tpu.dot_dimension_numbers<[1], [0], [0], [1], [0, 0, 1, 1], [], []>} : vector<8x128xf32>, vector<128x512xf32>, vector<8x512xf32> -> vector<8x512xf32>
    %174 = arith.addf %172, %173 : vector<8x512xf32>
    %175 = vector.extract_strided_slice %174 {offsets = [0, 0], sizes = [8, 128], strides = [1, 1]} : vector<8x512xf32> to vector<8x128xf32>
    %176 = arith.negf %175 : vector<8x128xf32>
    %177 = math.exp %176 : vector<8x128xf32>
    %cst_46 = arith.constant 1.000000e+00 : f32
    %178 = vector.broadcast %cst_46 : f32 to vector<8x128xf32>
    %179 = arith.addf %178, %177 : vector<8x128xf32>
    %180 = arith.divf %178, %179 : vector<8x128xf32>
    %181 = vector.extract_strided_slice %174 {offsets = [0, 128], sizes = [8, 128], strides = [1, 1]} : vector<8x512xf32> to vector<8x128xf32>
    %182 = arith.negf %181 : vector<8x128xf32>
    %183 = math.exp %182 : vector<8x128xf32>
    %cst_47 = arith.constant 1.000000e+00 : f32
    %184 = vector.broadcast %cst_47 : f32 to vector<8x128xf32>
    %185 = arith.addf %184, %183 : vector<8x128xf32>
    %186 = arith.divf %184, %185 : vector<8x128xf32>
    %187 = vector.extract_strided_slice %174 {offsets = [0, 256], sizes = [8, 128], strides = [1, 1]} : vector<8x512xf32> to vector<8x128xf32>
    %188 = math.tanh %187 : vector<8x128xf32>
    %189 = vector.extract_strided_slice %174 {offsets = [0, 384], sizes = [8, 128], strides = [1, 1]} : vector<8x512xf32> to vector<8x128xf32>
    %190 = arith.negf %189 : vector<8x128xf32>
    %191 = math.exp %190 : vector<8x128xf32>
    %cst_48 = arith.constant 1.000000e+00 : f32
    %192 = vector.broadcast %cst_48 : f32 to vector<8x128xf32>
    %193 = arith.addf %192, %191 : vector<8x128xf32>
    %194 = arith.divf %192, %193 : vector<8x128xf32>
    %195 = arith.mulf %186, %166 : vector<8x128xf32>
    %196 = arith.mulf %180, %188 : vector<8x128xf32>
    %197 = arith.addf %195, %196 : vector<8x128xf32>
    %198 = math.tanh %197 : vector<8x128xf32>
    %199 = arith.mulf %194, %198 : vector<8x128xf32>
    %c6_i32 = arith.constant 6 : i32
    %c8_i32_49 = arith.constant 8 : i32
    %200 = arith.muli %c6_i32, %c8_i32_49 : i32
    %201 = tpu.assume_multiple %200, 8 : i32
    %202 = arith.index_cast %201 : i32 to index
    %c0_50 = arith.constant 0 : index
    %203 = vector.load %arg7[%202, %c0_50] : memref<64x512xf32, #tpu.memory_space<vmem>>, vector<8x512xf32>
    %cst_51 = arith.constant dense<0.000000e+00> : vector<8x512xf32>
    %204 = tpu.matmul %199, %9, %cst_51 {dimension_numbers = #tpu.dot_dimension_numbers<[1], [0], [0], [1], [0, 0, 1, 1], [], []>} : vector<8x128xf32>, vector<128x512xf32>, vector<8x512xf32> -> vector<8x512xf32>
    %205 = arith.addf %203, %204 : vector<8x512xf32>
    %206 = vector.extract_strided_slice %205 {offsets = [0, 0], sizes = [8, 128], strides = [1, 1]} : vector<8x512xf32> to vector<8x128xf32>
    %207 = arith.negf %206 : vector<8x128xf32>
    %208 = math.exp %207 : vector<8x128xf32>
    %cst_52 = arith.constant 1.000000e+00 : f32
    %209 = vector.broadcast %cst_52 : f32 to vector<8x128xf32>
    %210 = arith.addf %209, %208 : vector<8x128xf32>
    %211 = arith.divf %209, %210 : vector<8x128xf32>
    %212 = vector.extract_strided_slice %205 {offsets = [0, 128], sizes = [8, 128], strides = [1, 1]} : vector<8x512xf32> to vector<8x128xf32>
    %213 = arith.negf %212 : vector<8x128xf32>
    %214 = math.exp %213 : vector<8x128xf32>
    %cst_53 = arith.constant 1.000000e+00 : f32
    %215 = vector.broadcast %cst_53 : f32 to vector<8x128xf32>
    %216 = arith.addf %215, %214 : vector<8x128xf32>
    %217 = arith.divf %215, %216 : vector<8x128xf32>
    %218 = vector.extract_strided_slice %205 {offsets = [0, 256], sizes = [8, 128], strides = [1, 1]} : vector<8x512xf32> to vector<8x128xf32>
    %219 = math.tanh %218 : vector<8x128xf32>
    %220 = vector.extract_strided_slice %205 {offsets = [0, 384], sizes = [8, 128], strides = [1, 1]} : vector<8x512xf32> to vector<8x128xf32>
    %221 = arith.negf %220 : vector<8x128xf32>
    %222 = math.exp %221 : vector<8x128xf32>
    %cst_54 = arith.constant 1.000000e+00 : f32
    %223 = vector.broadcast %cst_54 : f32 to vector<8x128xf32>
    %224 = arith.addf %223, %222 : vector<8x128xf32>
    %225 = arith.divf %223, %224 : vector<8x128xf32>
    %226 = arith.mulf %217, %197 : vector<8x128xf32>
    %227 = arith.mulf %211, %219 : vector<8x128xf32>
    %228 = arith.addf %226, %227 : vector<8x128xf32>
    %229 = math.tanh %228 : vector<8x128xf32>
    %230 = arith.mulf %225, %229 : vector<8x128xf32>
    %c7_i32 = arith.constant 7 : i32
    %c8_i32_55 = arith.constant 8 : i32
    %231 = arith.muli %c7_i32, %c8_i32_55 : i32
    %232 = tpu.assume_multiple %231, 8 : i32
    %233 = arith.index_cast %232 : i32 to index
    %c0_56 = arith.constant 0 : index
    %234 = vector.load %arg7[%233, %c0_56] : memref<64x512xf32, #tpu.memory_space<vmem>>, vector<8x512xf32>
    %cst_57 = arith.constant dense<0.000000e+00> : vector<8x512xf32>
    %235 = tpu.matmul %230, %9, %cst_57 {dimension_numbers = #tpu.dot_dimension_numbers<[1], [0], [0], [1], [0, 0, 1, 1], [], []>} : vector<8x128xf32>, vector<128x512xf32>, vector<8x512xf32> -> vector<8x512xf32>
    %236 = arith.addf %234, %235 : vector<8x512xf32>
    %237 = vector.extract_strided_slice %236 {offsets = [0, 0], sizes = [8, 128], strides = [1, 1]} : vector<8x512xf32> to vector<8x128xf32>
    %238 = arith.negf %237 : vector<8x128xf32>
    %239 = math.exp %238 : vector<8x128xf32>
    %cst_58 = arith.constant 1.000000e+00 : f32
    %240 = vector.broadcast %cst_58 : f32 to vector<8x128xf32>
    %241 = arith.addf %240, %239 : vector<8x128xf32>
    %242 = arith.divf %240, %241 : vector<8x128xf32>
    %243 = vector.extract_strided_slice %236 {offsets = [0, 128], sizes = [8, 128], strides = [1, 1]} : vector<8x512xf32> to vector<8x128xf32>
    %244 = arith.negf %243 : vector<8x128xf32>
    %245 = math.exp %244 : vector<8x128xf32>
    %cst_59 = arith.constant 1.000000e+00 : f32
    %246 = vector.broadcast %cst_59 : f32 to vector<8x128xf32>
    %247 = arith.addf %246, %245 : vector<8x128xf32>
    %248 = arith.divf %246, %247 : vector<8x128xf32>
    %249 = vector.extract_strided_slice %236 {offsets = [0, 256], sizes = [8, 128], strides = [1, 1]} : vector<8x512xf32> to vector<8x128xf32>
    %250 = math.tanh %249 : vector<8x128xf32>
    %251 = vector.extract_strided_slice %236 {offsets = [0, 384], sizes = [8, 128], strides = [1, 1]} : vector<8x512xf32> to vector<8x128xf32>
    %252 = arith.negf %251 : vector<8x128xf32>
    %253 = math.exp %252 : vector<8x128xf32>
    %cst_60 = arith.constant 1.000000e+00 : f32
    %254 = vector.broadcast %cst_60 : f32 to vector<8x128xf32>
    %255 = arith.addf %254, %253 : vector<8x128xf32>
    %256 = arith.divf %254, %255 : vector<8x128xf32>
    %257 = arith.mulf %248, %228 : vector<8x128xf32>
    %258 = arith.mulf %242, %250 : vector<8x128xf32>
    %259 = arith.addf %257, %258 : vector<8x128xf32>
    %260 = math.tanh %259 : vector<8x128xf32>
    %261 = arith.mulf %256, %260 : vector<8x128xf32>
    %c8_i32_61 = arith.constant 8 : i32
    %262 = vector.broadcast %10 : vector<1x128xf32> to vector<8x128xf32>
    %263 = arith.mulf %261, %262 : vector<8x128xf32>
    %cst_62 = arith.constant dense<0.000000e+00> : vector<8xf32>
    %264 = vector.multi_reduction <add>, %263, %cst_62 [1] : vector<8x128xf32> to vector<8xf32>
    %265 = vector.shape_cast %264 : vector<8xf32> to vector<8x1xf32>
    %266 = vector.broadcast %11 : vector<1x1xf32> to vector<8x1xf32>
    %267 = arith.addf %265, %266 : vector<8x1xf32>
    %c0_63 = arith.constant 0 : index
    %c0_64 = arith.constant 0 : index
    %268 = vector.load %arg6[%c0_63, %c0_64] : memref<8x1xf32, #tpu.memory_space<vmem>>, vector<8x1xf32>
    tpu.vector_store %arg6[%c0_63, %c0_64], %267 {strides = array<i32>} : memref<8x1xf32, #tpu.memory_space<vmem>>, vector<8x1xf32>,
    return
  }
}

</mosaic_0001>

<llo_original>
// kernel: tpu_custom_call.1
$region0: #{tpu_custom_call.1}
  #allocation0 [shape = 'u32[]', space=smem, size = 0x4, offset = 0x4, fixed_abs, tag = 'smem constant byte address 0x4 - core index']
  #allocation1 [shape = 'u32[72,128]{1,0:T(1,128)}', space=vmem, size = 0x9000, scoped, tag = 'internal scratch']
  #allocation2 [shape = 'f32[64,512]{1,0:T(8,128)}', space=vmem, size = 0x20000, scoped, tag = 'scratch operand']
  #allocation3 [shape = 'f32[1,1]{1,0:T(1,128)S(1)}', space=vmem, size = 0x200, scoped, tag = 'scoped memory for tpu_custom_call.1']
  %s0 = inlined_call_operand.vmem [shape: f32[64,1], index: 0, kind: input, shape index: {}]
  %s1 = inlined_call_operand.vmem [shape: f32[1,512], index: 1, kind: input, shape index: {}]
  %s2 = inlined_call_operand.hbm [shape: f32[128,512], index: 2, kind: input, shape index: {}]
  %s3 = inlined_call_operand.vmem [shape: f32[1,512], index: 3, kind: input, shape index: {}]
  %s4 = inlined_call_operand.vmem [shape: f32[1,128], index: 4, kind: input, shape index: {}]
  %s5 = inlined_call_operand.<no memory space> [shape: f32[1,1], index: 5, kind: input, shape index: {}]
  %s6 = inlined_call_operand.vmem [shape: f32[8,1], index: 6, kind: output, shape index: {}]
  %s7 = sld [smem:[#allocation0]]
  $region38: #{tpu_custom_call.1} parent=0
    _
  %s9 = ssub.s32 1, %s7
  %s10 = scalar_select 0, %s9, %s7
  %v11 = vstv %s5
  %12 = vst [vmem:[#allocation3] sm:$0x1] %v11
  $region1: #{tpu_custom_call.1} parent=0
    #allocation4 [shape = 'u8[262144]{0}', space=vmem, size = 0x40000, scoped, tag = 'input window, operand 2, single buffered']
    #allocation5 [shape = 's32[1]{0}', space=sflag, size = 0x4, scoped, tag = 'scoped memory for tpu_custom_call.1']
    %13 = vsyncpa [#allocation5], 0
    // Predicated region
    $region2: #{tpu_custom_call.1} parent=1 // pred_check
      _
    $region3: #{tpu_custom_call.1} parent=1 // pred_check_branch
      %15 = sbr.rel (0) target = $region5
    $region4: #{tpu_custom_call.1} parent=1 // pred_region
      _
    $region5: #{tpu_custom_call.1} parent=1 // pred_fallthru
      _
    // Predicated region
    $region6: #{tpu_custom_call.1} parent=1 // pred_check
      _
    $region7: #{tpu_custom_call.1} parent=1 // pred_check_branch
      %17 = sbr.rel (0) target = $region9
    $region8: #{tpu_custom_call.1} parent=1 // pred_region
      _
    $region9: #{tpu_custom_call.1} parent=1 // pred_fallthru
      _
    // Predicated region
    $region10: #{tpu_custom_call.1} parent=1 // pred_check
      _
    $region11: #{tpu_custom_call.1} parent=1 // pred_check_branch
      %19 = sbr.rel (0) target = $region13
    $region12: #{tpu_custom_call.1} parent=1 // pred_region
      %21 = vsyncadd [#allocation5], 0
      %s22 = sshll.u32 %s2, 4
      %s23 = int_to_ptr.hbm [resolvable:$true] %s22
      %s24 = sshll.u32 [#allocation4], 4
      %s25 = int_to_ptr.vmem [resolvable:$true] %s24
      %30 = dma.hbm_to_vmem [thread:$0]  %s23, 8192, %s25, [#allocation5], 512, 512, 32
    $region13: #{tpu_custom_call.1} parent=1 // pred_fallthru
      _
    // Predicated region
    $region14: #{tpu_custom_call.1} parent=1 // pred_check
      _
    $region15: #{tpu_custom_call.1} parent=1 // pred_check_branch
      %32 = sbr.rel (0) target = $region17
    $region16: #{tpu_custom_call.1} parent=1 // pred_region
      _
    $region17: #{tpu_custom_call.1} parent=1 // pred_fallthru
      _
    // Predicated region
    $region18: #{tpu_custom_call.1} parent=1 // pred_check
      _
    $region19: #{tpu_custom_call.1} parent=1 // pred_check_branch
      %34 = sbr.rel (0) target = $region21
    $region20: #{tpu_custom_call.1} parent=1 // pred_region
      _
    $region21: #{tpu_custom_call.1} parent=1 // pred_fallthru
      _
    // Predicated region
    $region22: #{tpu_custom_call.1} parent=1 // pred_check
      _
    $region23: #{tpu_custom_call.1} parent=1 // pred_check_branch
      %36 = sbr.rel (0) target = $region25
    $region24: #{tpu_custom_call.1} parent=1 // pred_region
      _
    $region25: #{tpu_custom_call.1} parent=1 // pred_fallthru
      _
    // Predicated region
    $region26: #{tpu_custom_call.1} parent=1 // pred_check
      _
    $region27: #{tpu_custom_call.1} parent=1 // pred_check_branch
      %38 = sbr.rel (0) target = $region29
    $region28: #{tpu_custom_call.1} parent=1 // pred_region
      %40 = dma.done [#allocation5], 8192
    $region29: #{tpu_custom_call.1} parent=1 // pred_fallthru
      _
    %v41 = vld [vmem:[%s0] sm:$0xff]
    %v42 = vld [vmem:[%s0 + $0x8] sm:$0xff]
    %v43 = vld [vmem:[%s0 + $0x10] sm:$0xff]
    %v44 = vld [vmem:[%s0 + $0x18] sm:$0xff]
    %v45 = vld [vmem:[%s0 + $0x20] sm:$0xff]
    %v46 = vld [vmem:[%s0 + $0x28] sm:$0xff]
    %v47 = vld [vmem:[%s0 + $0x30] sm:$0xff]
    %v48 = vld [vmem:[%s0 + $0x38] sm:$0xff]
    %v49 = vld [vmem:[%s1] sm:$0xf]
    %51 = vset.pattern.permute.xlu0 0
    %52 = vperm.xlu0 %51, %v41
    %v53 = vpop.permute.xlu0 %52
    %56 = vset.pattern.permute.xlu0 0
    %57 = vperm.xlu0 %56, %v42
    %v58 = vpop.permute.xlu0 %57
    %61 = vset.pattern.permute.xlu0 0
    %62 = vperm.xlu0 %61, %v43
    %v63 = vpop.permute.xlu0 %62
    %66 = vset.pattern.permute.xlu0 0
    %67 = vperm.xlu0 %66, %v44
    %v68 = vpop.permute.xlu0 %67
    %71 = vset.pattern.permute.xlu0 0
    %72 = vperm.xlu0 %71, %v45
    %v73 = vpop.permute.xlu0 %72
    %76 = vset.pattern.permute.xlu0 0
    %77 = vperm.xlu0 %76, %v46
    %v78 = vpop.permute.xlu0 %77
    %81 = vset.pattern.permute.xlu0 0
    %82 = vperm.xlu0 %81, %v47
    %v83 = vpop.permute.xlu0 %82
    %86 = vset.pattern.permute.xlu0 0
    %87 = vperm.xlu0 %86, %v48
    %v88 = vpop.permute.xlu0 %87
    %v91 = vperm.slane %v49, 0
    %v92 = vperm.slane %v49, 1
    %v93 = vperm.slane %v49, 2
    %v94 = vperm.slane %v49, 3
    %v99 = vmul.f32 %v53, %v91
    %v100 = vmul.f32 %v53, %v92
    %v101 = vmul.f32 %v53, %v93
    %v102 = vmul.f32 %v53, %v94
    %v103 = vmul.f32 %v58, %v91
    %v104 = vmul.f32 %v58, %v92
    %v105 = vmul.f32 %v58, %v93
    %v106 = vmul.f32 %v58, %v94
    %v107 = vmul.f32 %v63, %v91
    %v108 = vmul.f32 %v63, %v92
    %v109 = vmul.f32 %v63, %v93
    %v110 = vmul.f32 %v63, %v94
    %v111 = vmul.f32 %v68, %v91
    %v112 = vmul.f32 %v68, %v92
    %v113 = vmul.f32 %v68, %v93
    %v114 = vmul.f32 %v68, %v94
    %v115 = vmul.f32 %v73, %v91
    %v116 = vmul.f32 %v73, %v92
    %v117 = vmul.f32 %v73, %v93
    %v118 = vmul.f32 %v73, %v94
    %v119 = vmul.f32 %v78, %v91
    %v120 = vmul.f32 %v78, %v92
    %v121 = vmul.f32 %v78, %v93
    %v122 = vmul.f32 %v78, %v94
    %v123 = vmul.f32 %v83, %v91
    %v124 = vmul.f32 %v83, %v92
    %v125 = vmul.f32 %v83, %v93
    %v126 = vmul.f32 %v83, %v94
    %v127 = vmul.f32 %v88, %v91
    %v128 = vmul.f32 %v88, %v92
    %v129 = vmul.f32 %v88, %v93
    %v130 = vmul.f32 %v88, %v94
    %v131 = vld [vmem:[%s3] sm:$0xf]
    %v133 = vperm.slane %v131, 0
    %v134 = vperm.slane %v131, 1
    %v135 = vperm.slane %v131, 2
    %v136 = vperm.slane %v131, 3
    %v141 = vadd.f32 %v99, %v133
    %v142 = vadd.f32 %v100, %v134
    %v143 = vadd.f32 %v101, %v135
    %v144 = vadd.f32 %v102, %v136
    %v145 = vadd.f32 %v103, %v133
    %v146 = vadd.f32 %v104, %v134
    %v147 = vadd.f32 %v105, %v135
    %v148 = vadd.f32 %v106, %v136
    %v149 = vadd.f32 %v107, %v133
    %v150 = vadd.f32 %v108, %v134
    %v151 = vadd.f32 %v109, %v135
    %v152 = vadd.f32 %v110, %v136
    %v153 = vadd.f32 %v111, %v133
    %v154 = vadd.f32 %v112, %v134
    %v155 = vadd.f32 %v113, %v135
    %v156 = vadd.f32 %v114, %v136
    %v157 = vadd.f32 %v115, %v133
    %v158 = vadd.f32 %v116, %v134
    %v159 = vadd.f32 %v117, %v135
    %v160 = vadd.f32 %v118, %v136
    %v161 = vadd.f32 %v119, %v133
    %v162 = vadd.f32 %v120, %v134
    %v163 = vadd.f32 %v121, %v135
    %v164 = vadd.f32 %v122, %v136
    %v165 = vadd.f32 %v123, %v133
    %v166 = vadd.f32 %v124, %v134
    %v167 = vadd.f32 %v125, %v135
    %v168 = vadd.f32 %v126, %v136
    %v169 = vadd.f32 %v127, %v133
    %v170 = vadd.f32 %v128, %v134
    %v171 = vadd.f32 %v129, %v135
    %v172 = vadd.f32 %v130, %v136
    %173 = vst [vmem:[#allocation2] sm:$0xff] %v141
    %174 = vst [vmem:[#allocation2 + $0x8] sm:$0xff] %v142
    %175 = vst [vmem:[#allocation2 + $0x10] sm:$0xff] %v143
    %176 = vst [vmem:[#allocation2 + $0x18] sm:$0xff] %v144
    %177 = vst [vmem:[#allocation2 + $0x20] sm:$0xff] %v145
    %178 = vst [vmem:[#allocation2 + $0x28] sm:$0xff] %v146
    %179 = vst [vmem:[#allocation2 + $0x30] sm:$0xff] %v147
    %180 = vst [vmem:[#allocation2 + $0x38] sm:$0xff] %v148
    %181 = vst [vmem:[#allocation2 + $0x40] sm:$0xff] %v149
    %182 = vst [vmem:[#allocation2 + $0x48] sm:$0xff] %v150
    %183 = vst [vmem:[#allocation2 + $0x50] sm:$0xff] %v151
    %184 = vst [vmem:[#allocation2 + $0x58] sm:$0xff] %v152
    %185 = vst [vmem:[#allocation2 + $0x60] sm:$0xff] %v153
    %186 = vst [vmem:[#allocation2 + $0x68] sm:$0xff] %v154
    %187 = vst [vmem:[#allocation2 + $0x70] sm:$0xff] %v155
    %188 = vst [vmem:[#allocation2 + $0x78] sm:$0xff] %v156
    %189 = vst [vmem:[#allocation2 + $0x80] sm:$0xff] %v157
    %190 = vst [vmem:[#allocation2 + $0x88] sm:$0xff] %v158
    %191 = vst [vmem:[#allocation2 + $0x90] sm:$0xff] %v159
    %192 = vst [vmem:[#allocation2 + $0x98] sm:$0xff] %v160
    %193 = vst [vmem:[#allocation2 + $0xa0] sm:$0xff] %v161
    %194 = vst [vmem:[#allocation2 + $0xa8] sm:$0xff] %v162
    %195 = vst [vmem:[#allocation2 + $0xb0] sm:$0xff] %v163
    %196 = vst [vmem:[#allocation2 + $0xb8] sm:$0xff] %v164
    %197 = vst [vmem:[#allocation2 + $0xc0] sm:$0xff] %v165
    %198 = vst [vmem:[#allocation2 + $0xc8] sm:$0xff] %v166
    %199 = vst [vmem:[#allocation2 + $0xd0] sm:$0xff] %v167
    %200 = vst [vmem:[#allocation2 + $0xd8] sm:$0xff] %v168
    %201 = vst [vmem:[#allocation2 + $0xe0] sm:$0xff] %v169
    %202 = vst [vmem:[#allocation2 + $0xe8] sm:$0xff] %v170
    %203 = vst [vmem:[#allocation2 + $0xf0] sm:$0xff] %v171
    %204 = vst [vmem:[#allocation2 + $0xf8] sm:$0xff] %v172
    %v205 = vld [vmem:[#allocation4] sm:$0xff]
    %v206 = vld [vmem:[#allocation4 + $0x8] sm:$0xff]
    %v207 = vld [vmem:[#allocation4 + $0x10] sm:$0xff]
    %v208 = vld [vmem:[#allocation4 + $0x18] sm:$0xff]
    %v209 = vld [vmem:[#allocation4 + $0x20] sm:$0xff]
    %v210 = vld [vmem:[#allocation4 + $0x28] sm:$0xff]
    %v211 = vld [vmem:[#allocation4 + $0x30] sm:$0xff]
    %v212 = vld [vmem:[#allocation4 + $0x38] sm:$0xff]
    %v213 = vld [vmem:[#allocation4 + $0x40] sm:$0xff]
    %v214 = vld [vmem:[#allocation4 + $0x48] sm:$0xff]
    %v215 = vld [vmem:[#allocation4 + $0x50] sm:$0xff]
    %v216 = vld [vmem:[#allocation4 + $0x58] sm:$0xff]
    %v217 = vld [vmem:[#allocation4 + $0x60] sm:$0xff]
    %v218 = vld [vmem:[#allocation4 + $0x68] sm:$0xff]
    %v219 = vld [vmem:[#allocation4 + $0x70] sm:$0xff]
    %v220 = vld [vmem:[#allocation4 + $0x78] sm:$0xff]
    %v221 = vld [vmem:[#allocation4 + $0x80] sm:$0xff]
    %v222 = vld [vmem:[#allocation4 + $0x88] sm:$0xff]
    %v223 = vld [vmem:[#allocation4 + $0x90] sm:$0xff]
    %v224 = vld [vmem:[#allocation4 + $0x98] sm:$0xff]
    %v225 = vld [vmem:[#allocation4 + $0xa0] sm:$0xff]
    %v226 = vld [vmem:[#allocation4 + $0xa8] sm:$0xff]
    %v227 = vld [vmem:[#allocation4 + $0xb0] sm:$0xff]
    %v228 = vld [vmem:[#allocation4 + $0xb8] sm:$0xff]
    %v229 = vld [vmem:[#allocation4 + $0xc0] sm:$0xff]
    %v230 = vld [vmem:[#allocation4 + $0xc8] sm:$0xff]
    %v231 = vld [vmem:[#allocation4 + $0xd0] sm:$0xff]
    %v232 = vld [vmem:[#allocation4 + $0xd8] sm:$0xff]
    %v233 = vld [vmem:[#allocation4 + $0xe0] sm:$0xff]
    %v234 = vld [vmem:[#allocation4 + $0xe8] sm:$0xff]
    %v235 = vld [vmem:[#allocation4 + $0xf0] sm:$0xff]
    %v236 = vld [vmem:[#allocation4 + $0xf8] sm:$0xff]
    %v237 = vld [vmem:[#allocation4 + $0x100] sm:$0xff]
    %v238 = vld [vmem:[#allocation4 + $0x108] sm:$0xff]
    %v239 = vld [vmem:[#allocation4 + $0x110] sm:$0xff]
    %v240 = vld [vmem:[#allocation4 + $0x118] sm:$0xff]
    %v241 = vld [vmem:[#allocation4 + $0x120] sm:$0xff]
    %v242 = vld [vmem:[#allocation4 + $0x128] sm:$0xff]
    %v243 = vld [vmem:[#allocation4 + $0x130] sm:$0xff]
    %v244 = vld [vmem:[#allocation4 + $0x138] sm:$0xff]
    %v245 = vld [vmem:[#allocation4 + $0x140] sm:$0xff]
    %v246 = vld [vmem:[#allocation4 + $0x148] sm:$0xff]
    %v247 = vld [vmem:[#allocation4 + $0x150] sm:$0xff]
    %v248 = vld [vmem:[#allocation4 + $0x158] sm:$0xff]
    %v249 = vld [vmem:[#allocation4 + $0x160] sm:$0xff]
    %v250 = vld [vmem:[#allocation4 + $0x168] sm:$0xff]
    %v251 = vld [vmem:[#allocation4 + $0x170] sm:$0xff]
    %v252 = vld [vmem:[#allocation4 + $0x178] sm:$0xff]
    %v253 = vld [vmem:[#allocation4 + $0x180] sm:$0xff]
    %v254 = vld [vmem:[#allocation4 + $0x188] sm:$0xff]
    %v255 = vld [vmem:[#allocation4 + $0x190] sm:$0xff]
    %v256 = vld [vmem:[#allocation4 + $0x198] sm:$0xff]
    %v257 = vld [vmem:[#allocation4 + $0x1a0] sm:$0xff]
    %v258 = vld [vmem:[#allocation4 + $0x1a8] sm:$0xff]
    %v259 = vld [vmem:[#allocation4 + $0x1b0] sm:$0xff]
    %v260 = vld [vmem:[#allocation4 + $0x1b8] sm:$0xff]
    %v261 = vld [vmem:[#allocation4 + $0x1c0] sm:$0xff]
    %v262 = vld [vmem:[#allocation4 + $0x1c8] sm:$0xff]
    %v263 = vld [vmem:[#allocation4 + $0x1d0] sm:$0xff]
    %v264 = vld [vmem:[#allocation4 + $0x1d8] sm:$0xff]
    %v265 = vld [vmem:[#allocation4 + $0x1e0] sm:$0xff]
    %v266 = vld [vmem:[#allocation4 + $0x1e8] sm:$0xff]
    %v267 = vld [vmem:[#allocation4 + $0x1f0] sm:$0xff]
    %v268 = vld [vmem:[#allocation4 + $0x1f8] sm:$0xff]
    %v269 = vld [vmem:[%s4] sm:$0x1]
    %v270 = vld [vmem:[#allocation3] sm:$0x1]
    %s271 = smul.u32 0, 4
    %s272 = smul.addr %s271, 8
    %s273 = scalar_lea.vmem [#allocation2], %s272
    %v274 = vld [vmem:[%s273] sm:$0xff]
    %v275 = vld [vmem:[%s273 + $0x8] sm:$0xff]
    %v276 = vld [vmem:[%s273 + $0x10] sm:$0xff]
    %v277 = vld [vmem:[%s273 + $0x18] sm:$0xff]
    %278 = vmatpush.msra.mxu0 %v265
    %279 = vmatpush.msra.mxu0 %v261
    %280 = vmatpush.msra.mxu0 %v257
    %281 = vmatpush.msra.mxu0 %v253
    %282 = vmatpush.msra.mxu0 %v249
    %283 = vmatpush.msra.mxu0 %v245
    %284 = vmatpush.msra.mxu0 %v241
    %285 = vmatpush.msra.mxu0 %v237
    %286 = vmatpush.msra.mxu0 %v233
    %287 = vmatpush.msra.mxu0 %v229
    %288 = vmatpush.msra.mxu0 %v225
    %289 = vmatpush.msra.mxu0 %v221
    %290 = vmatpush.msra.mxu0 %v217
    %291 = vmatpush.msra.mxu0 %v213
    %292 = vmatpush.msra.mxu0 %v209
    %293 = vmatpush.msra.mxu0 %v205
    %294 = vmatmul.f32.gmra.mxu0 0.0
    %v295 = vpop.f32.mrf.mxu0
    %v296 = vadd.f32 0.0, %v295
    %297 = vdwg.mxu0
    %298 = vmatpush.msra.mxu0 %v266
    %299 = vmatpush.msra.mxu0 %v262
    %300 = vmatpush.msra.mxu0 %v258
    %301 = vmatpush.msra.mxu0 %v254
    %302 = vmatpush.msra.mxu0 %v250
    %303 = vmatpush.msra.mxu0 %v246
    %304 = vmatpush.msra.mxu0 %v242
    %305 = vmatpush.msra.mxu0 %v238
    %306 = vmatpush.msra.mxu0 %v234
    %307 = vmatpush.msra.mxu0 %v230
    %308 = vmatpush.msra.mxu0 %v226
    %309 = vmatpush.msra.mxu0 %v222
    %310 = vmatpush.msra.mxu0 %v218
    %311 = vmatpush.msra.mxu0 %v214
    %312 = vmatpush.msra.mxu0 %v210
    %313 = vmatpush.msra.mxu0 %v206
    %314 = vmatmul.f32.gmra.mxu0 0.0
    %v315 = vpop.f32.mrf.mxu0
    %v316 = vadd.f32 0.0, %v315
    %317 = vdwg.mxu0
    %318 = vmatpush.msra.mxu0 %v267
    %319 = vmatpush.msra.mxu0 %v263
    %320 = vmatpush.msra.mxu0 %v259
    %321 = vmatpush.msra.mxu0 %v255
    %322 = vmatpush.msra.mxu0 %v251
    %323 = vmatpush.msra.mxu0 %v247
    %324 = vmatpush.msra.mxu0 %v243
    %325 = vmatpush.msra.mxu0 %v239
    %326 = vmatpush.msra.mxu0 %v235
    %327 = vmatpush.msra.mxu0 %v231
    %328 = vmatpush.msra.mxu0 %v227
    %329 = vmatpush.msra.mxu0 %v223
    %330 = vmatpush.msra.mxu0 %v219
    %331 = vmatpush.msra.mxu0 %v215
    %332 = vmatpush.msra.mxu0 %v211
    %333 = vmatpush.msra.mxu0 %v207
    %334 = vmatmul.f32.gmra.mxu0 0.0
    %v335 = vpop.f32.mrf.mxu0
    %v336 = vadd.f32 0.0, %v335
    %337 = vdwg.mxu0
    %338 = vmatpush.msra.mxu0 %v268
    %339 = vmatpush.msra.mxu0 %v264
    %340 = vmatpush.msra.mxu0 %v260
    %341 = vmatpush.msra.mxu0 %v256
    %342 = vmatpush.msra.mxu0 %v252
    %343 = vmatpush.msra.mxu0 %v248
    %344 = vmatpush.msra.mxu0 %v244
    %345 = vmatpush.msra.mxu0 %v240
    %346 = vmatpush.msra.mxu0 %v236
    %347 = vmatpush.msra.mxu0 %v232
    %348 = vmatpush.msra.mxu0 %v228
    %349 = vmatpush.msra.mxu0 %v224
    %350 = vmatpush.msra.mxu0 %v220
    %351 = vmatpush.msra.mxu0 %v216
    %352 = vmatpush.msra.mxu0 %v212
    %353 = vmatpush.msra.mxu0 %v208
    %354 = vmatmul.f32.gmra.mxu0 0.0
    %v355 = vpop.f32.mrf.mxu0
    %v356 = vadd.f32 0.0, %v355
    %357 = vdwg.mxu0
    %v358 = vadd.f32 %v274, %v296
    %v359 = vadd.f32 %v275, %v316
    %v360 = vadd.f32 %v276, %v336
    %v361 = vadd.f32 %v277, %v356
    %v362 = vxor.u32 %v358, 2147483648
    %v363 = vmul.f32 %v362, 1.442695
    %v364 = vpow.pop %v363
    %v365 = vadd.f32 %v364, 1.0
    %v366 = vrcp.pop %v365
    %v367 = vmul.f32 %v365, %v366
    %v368 = vsub.f32 1.0, %v367
    %v369 = vmul.f32 %v366, %v368
    %v370 = vadd.f32 %v366, %v369
    %vm371 = vweird.f32 %v365
    %vm372 = vweird.f32 %v366
    %vm373 = vmor %vm371, %vm372
    %v374 = vsel %vm373, %v366, %v370
    %v375 = vand.u32 2147483647, %v365
    %vm376 = vcmp.eq.f32.partialorder %v375, 8.507059e+37
    %v377 = vand.u32 %v365, 2147483648
    %v378 = vor.u32 1.1754944e-38, %v377
    %v379 = vsel %vm376, %v378, %v374
    %v380 = vmul.f32 1.0, %v379
    %v381 = vxor.u32 %v359, 2147483648
    %v382 = vmul.f32 %v381, 1.442695
    %v383 = vpow.pop %v382
    %v384 = vadd.f32 %v383, 1.0
    %v385 = vrcp.pop %v384
    %v386 = vmul.f32 %v384, %v385
    %v387 = vsub.f32 1.0, %v386
    %v388 = vmul.f32 %v385, %v387
    %v389 = vadd.f32 %v385, %v388
    %vm390 = vweird.f32 %v384
    %vm391 = vweird.f32 %v385
    %vm392 = vmor %vm390, %vm391
    %v393 = vsel %vm392, %v385, %v389
    %v394 = vand.u32 2147483647, %v384
    %vm395 = vcmp.eq.f32.partialorder %v394, 8.507059e+37
    %v396 = vand.u32 %v384, 2147483648
    %v397 = vor.u32 1.1754944e-38, %v396
    %v398 = vsel %vm395, %v397, %v393
    %v399 = vmul.f32 1.0, %v398
    %v400 = vtanh.pop %v360
    %v401 = vxor.u32 %v361, 2147483648
    %v402 = vmul.f32 %v401, 1.442695
    %v403 = vpow.pop %v402
    %v404 = vadd.f32 %v403, 1.0
    %v405 = vrcp.pop %v404
    %v406 = vmul.f32 %v404, %v405
    %v407 = vsub.f32 1.0, %v406
    %v408 = vmul.f32 %v405, %v407
    %v409 = vadd.f32 %v405, %v408
    %vm410 = vweird.f32 %v404
    %vm411 = vweird.f32 %v405
    %vm412 = vmor %vm410, %vm411
    %v413 = vsel %vm412, %v405, %v409
    %v414 = vand.u32 2147483647, %v404
    %vm415 = vcmp.eq.f32.partialorder %v414, 8.507059e+37
    %v416 = vand.u32 %v404, 2147483648
    %v417 = vor.u32 1.1754944e-38, %v416
    %v418 = vsel %vm415, %v417, %v413
    %v419 = vmul.f32 1.0, %v418
    %v420 = vmul.f32 %v399, 0.0
    %v421 = vmul.f32 %v380, %v400
    %v422 = vadd.f32 %v420, %v421
    %v423 = vtanh.pop %v422
    %v424 = vmul.f32 %v419, %v423
    %s425 = smul.u32 1, 4
    %s426 = smul.addr %s425, 8
    %s427 = scalar_lea.vmem [#allocation2], %s426
    %v428 = vld [vmem:[%s427] sm:$0xff]
    %v429 = vld [vmem:[%s427 + $0x8] sm:$0xff]
    %v430 = vld [vmem:[%s427 + $0x10] sm:$0xff]
    %v431 = vld [vmem:[%s427 + $0x18] sm:$0xff]
    %432 = vmatpush.msra.mxu0 %v265
    %433 = vmatpush.msra.mxu0 %v261
    %434 = vmatpush.msra.mxu0 %v257
    %435 = vmatpush.msra.mxu0 %v253
    %436 = vmatpush.msra.mxu0 %v249
    %437 = vmatpush.msra.mxu0 %v245
    %438 = vmatpush.msra.mxu0 %v241
    %439 = vmatpush.msra.mxu0 %v237
    %440 = vmatpush.msra.mxu0 %v233
    %441 = vmatpush.msra.mxu0 %v229
    %442 = vmatpush.msra.mxu0 %v225
    %443 = vmatpush.msra.mxu0 %v221
    %444 = vmatpush.msra.mxu0 %v217
    %445 = vmatpush.msra.mxu0 %v213
    %446 = vmatpush.msra.mxu0 %v209
    %447 = vmatpush.msra.mxu0 %v205
    %448 = vmatmul.f32.gmra.mxu0 %v424
    %v449 = vpop.f32.mrf.mxu0
    %v450 = vadd.f32 0.0, %v449
    %451 = vdwg.mxu0
    %452 = vmatpush.msra.mxu0 %v266
    %453 = vmatpush.msra.mxu0 %v262
    %454 = vmatpush.msra.mxu0 %v258
    %455 = vmatpush.msra.mxu0 %v254
    %456 = vmatpush.msra.mxu0 %v250
    %457 = vmatpush.msra.mxu0 %v246
    %458 = vmatpush.msra.mxu0 %v242
    %459 = vmatpush.msra.mxu0 %v238
    %460 = vmatpush.msra.mxu0 %v234
    %461 = vmatpush.msra.mxu0 %v230
    %462 = vmatpush.msra.mxu0 %v226
    %463 = vmatpush.msra.mxu0 %v222
    %464 = vmatpush.msra.mxu0 %v218
    %465 = vmatpush.msra.mxu0 %v214
    %466 = vmatpush.msra.mxu0 %v210
    %467 = vmatpush.msra.mxu0 %v206
    %468 = vmatmul.f32.gmra.mxu0 %v424
    %v469 = vpop.f32.mrf.mxu0
    %v470 = vadd.f32 0.0, %v469
    %471 = vdwg.mxu0
    %472 = vmatpush.msra.mxu0 %v267
    %473 = vmatpush.msra.mxu0 %v263
    %474 = vmatpush.msra.mxu0 %v259
    %475 = vmatpush.msra.mxu0 %v255
    %476 = vmatpush.msra.mxu0 %v251
    %477 = vmatpush.msra.mxu0 %v247
    %478 = vmatpush.msra.mxu0 %v243
    %479 = vmatpush.msra.mxu0 %v239
    %480 = vmatpush.msra.mxu0 %v235
    %481 = vmatpush.msra.mxu0 %v231
    %482 = vmatpush.msra.mxu0 %v227
    %483 = vmatpush.msra.mxu0 %v223
    %484 = vmatpush.msra.mxu0 %v219
    %485 = vmatpush.msra.mxu0 %v215
    %486 = vmatpush.msra.mxu0 %v211
    %487 = vmatpush.msra.mxu0 %v207
    %488 = vmatmul.f32.gmra.mxu0 %v424
    %v489 = vpop.f32.mrf.mxu0
    %v490 = vadd.f32 0.0, %v489
    %491 = vdwg.mxu0
    %492 = vmatpush.msra.mxu0 %v268
    %493 = vmatpush.msra.mxu0 %v264
    %494 = vmatpush.msra.mxu0 %v260
    %495 = vmatpush.msra.mxu0 %v256
    %496 = vmatpush.msra.mxu0 %v252
    %497 = vmatpush.msra.mxu0 %v248
    %498 = vmatpush.msra.mxu0 %v244
    %499 = vmatpush.msra.mxu0 %v240
    %500 = vmatpush.msra.mxu0 %v236
    %501 = vmatpush.msra.mxu0 %v232
    %502 = vmatpush.msra.mxu0 %v228
    %503 = vmatpush.msra.mxu0 %v224
    %504 = vmatpush.msra.mxu0 %v220
    %505 = vmatpush.msra.mxu0 %v216
    %506 = vmatpush.msra.mxu0 %v212
    %507 = vmatpush.msra.mxu0 %v208
    %508 = vmatmul.f32.gmra.mxu0 %v424
    %v509 = vpop.f32.mrf.mxu0
    %v510 = vadd.f32 0.0, %v509
    %511 = vdwg.mxu0
    %v512 = vadd.f32 %v428, %v450
    %v513 = vadd.f32 %v429, %v470
    %v514 = vadd.f32 %v430, %v490
    %v515 = vadd.f32 %v431, %v510
    %v516 = vxor.u32 %v512, 2147483648
    %v517 = vmul.f32 %v516, 1.442695
    %v518 = vpow.pop %v517
    %v519 = vadd.f32 %v518, 1.0
    %v520 = vrcp.pop %v519
    %v521 = vmul.f32 %v519, %v520
    %v522 = vsub.f32 1.0, %v521
    %v523 = vmul.f32 %v520, %v522
    %v524 = vadd.f32 %v520, %v523
    %vm525 = vweird.f32 %v519
    %vm526 = vweird.f32 %v520
    %vm527 = vmor %vm525, %vm526
    %v528 = vsel %vm527, %v520, %v524
    %v529 = vand.u32 2147483647, %v519
    %vm530 = vcmp.eq.f32.partialorder %v529, 8.507059e+37
    %v531 = vand.u32 %v519, 2147483648
    %v532 = vor.u32 1.1754944e-38, %v531
    %v533 = vsel %vm530, %v532, %v528
    %v534 = vmul.f32 1.0, %v533
    %v535 = vxor.u32 %v513, 2147483648
    %v536 = vmul.f32 %v535, 1.442695
    %v537 = vpow.pop %v536
    %v538 = vadd.f32 %v537, 1.0
    %v539 = vrcp.pop %v538
    %v540 = vmul.f32 %v538, %v539
    %v541 = vsub.f32 1.0, %v540
    %v542 = vmul.f32 %v539, %v541
    %v543 = vadd.f32 %v539, %v542
    %vm544 = vweird.f32 %v538
    %vm545 = vweird.f32 %v539
    %vm546 = vmor %vm544, %vm545
    %v547 = vsel %vm546, %v539, %v543
    %v548 = vand.u32 2147483647, %v538
    %vm549 = vcmp.eq.f32.partialorder %v548, 8.507059e+37
    %v550 = vand.u32 %v538, 2147483648
    %v551 = vor.u32 1.1754944e-38, %v550
    %v552 = vsel %vm549, %v551, %v547
    %v553 = vmul.f32 1.0, %v552
    %v554 = vtanh.pop %v514
    %v555 = vxor.u32 %v515, 2147483648
    %v556 = vmul.f32 %v555, 1.442695
    %v557 = vpow.pop %v556
    %v558 = vadd.f32 %v557, 1.0
    %v559 = vrcp.pop %v558
    %v560 = vmul.f32 %v558, %v559
    %v561 = vsub.f32 1.0, %v560
    %v562 = vmul.f32 %v559, %v561
    %v563 = vadd.f32 %v559, %v562
    %vm564 = vweird.f32 %v558
    %vm565 = vweird.f32 %v559
    %vm566 = vmor %vm564, %vm565
    %v567 = vsel %vm566, %v559, %v563
    %v568 = vand.u32 2147483647, %v558
    %vm569 = vcmp.eq.f32.partialorder %v568, 8.507059e+37
    %v570 = vand.u32 %v558, 2147483648
    %v571 = vor.u32 1.1754944e-38, %v570
    %v572 = vsel %vm569, %v571, %v567
    %v573 = vmul.f32 1.0, %v572
    %v574 = vmul.f32 %v553, %v422
    %v575 = vmul.f32 %v534, %v554
    %v576 = vadd.f32 %v574, %v575
    %v577 = vtanh.pop %v576
    %v578 = vmul.f32 %v573, %v577
    %s579 = smul.u32 2, 4
    %s580 = smul.addr %s579, 8
    %s581 = scalar_lea.vmem [#allocation2], %s580
    %v582 = vld [vmem:[%s581] sm:$0xff]
    %v583 = vld [vmem:[%s581 + $0x8] sm:$0xff]
    %v584 = vld [vmem:[%s581 + $0x10] sm:$0xff]
    %v585 = vld [vmem:[%s581 + $0x18] sm:$0xff]
    %586 = vmatpush.msra.mxu0 %v265
    %587 = vmatpush.msra.mxu0 %v261
    %588 = vmatpush.msra.mxu0 %v257
    %589 = vmatpush.msra.mxu0 %v253
    %590 = vmatpush.msra.mxu0 %v249
    %591 = vmatpush.msra.mxu0 %v245
    %592 = vmatpush.msra.mxu0 %v241
    %593 = vmatpush.msra.mxu0 %v237
    %594 = vmatpush.msra.mxu0 %v233
    %595 = vmatpush.msra.mxu0 %v229
    %596 = vmatpush.msra.mxu0 %v225
    %597 = vmatpush.msra.mxu0 %v221
    %598 = vmatpush.msra.mxu0 %v217
    %599 = vmatpush.msra.mxu0 %v213
    %600 = vmatpush.msra.mxu0 %v209
    %601 = vmatpush.msra.mxu0 %v205
    %602 = vmatmul.f32.gmra.mxu0 %v578
    %v603 = vpop.f32.mrf.mxu0
    %v604 = vadd.f32 0.0, %v603
    %605 = vdwg.mxu0
    %606 = vmatpush.msra.mxu0 %v266
    %607 = vmatpush.msra.mxu0 %v262
    %608 = vmatpush.msra.mxu0 %v258
    %609 = vmatpush.msra.mxu0 %v254
    %610 = vmatpush.msra.mxu0 %v250
    %611 = vmatpush.msra.mxu0 %v246
    %612 = vmatpush.msra.mxu0 %v242
    %613 = vmatpush.msra.mxu0 %v238
    %614 = vmatpush.msra.mxu0 %v234
    %615 = vmatpush.msra.mxu0 %v230
    %616 = vmatpush.msra.mxu0 %v226
    %617 = vmatpush.msra.mxu0 %v222
    %618 = vmatpush.msra.mxu0 %v218
    %619 = vmatpush.msra.mxu0 %v214
    %620 = vmatpush.msra.mxu0 %v210
    %621 = vmatpush.msra.mxu0 %v206
    %622 = vmatmul.f32.gmra.mxu0 %v578
    %v623 = vpop.f32.mrf.mxu0
    %v624 = vadd.f32 0.0, %v623
    %625 = vdwg.mxu0
    %626 = vmatpush.msra.mxu0 %v267
    %627 = vmatpush.msra.mxu0 %v263
    %628 = vmatpush.msra.mxu0 %v259
    %629 = vmatpush.msra.mxu0 %v255
    %630 = vmatpush.msra.mxu0 %v251
    %631 = vmatpush.msra.mxu0 %v247
    %632 = vmatpush.msra.mxu0 %v243
    %633 = vmatpush.msra.mxu0 %v239
    %634 = vmatpush.msra.mxu0 %v235
    %635 = vmatpush.msra.mxu0 %v231
    %636 = vmatpush.msra.mxu0 %v227
    %637 = vmatpush.msra.mxu0 %v223
    %638 = vmatpush.msra.mxu0 %v219
    %639 = vmatpush.msra.mxu0 %v215
    %640 = vmatpush.msra.mxu0 %v211
    %641 = vmatpush.msra.mxu0 %v207
    %642 = vmatmul.f32.gmra.mxu0 %v578
    %v643 = vpop.f32.mrf.mxu0
    %v644 = vadd.f32 0.0, %v643
    %645 = vdwg.mxu0
    %646 = vmatpush.msra.mxu0 %v268
    %647 = vmatpush.msra.mxu0 %v264
    %648 = vmatpush.msra.mxu0 %v260
    %649 = vmatpush.msra.mxu0 %v256
    %650 = vmatpush.msra.mxu0 %v252
    %651 = vmatpush.msra.mxu0 %v248
    %652 = vmatpush.msra.mxu0 %v244
    %653 = vmatpush.msra.mxu0 %v240
    %654 = vmatpush.msra.mxu0 %v236
    %655 = vmatpush.msra.mxu0 %v232
    %656 = vmatpush.msra.mxu0 %v228
    %657 = vmatpush.msra.mxu0 %v224
    %658 = vmatpush.msra.mxu0 %v220
    %659 = vmatpush.msra.mxu0 %v216
    %660 = vmatpush.msra.mxu0 %v212
    %661 = vmatpush.msra.mxu0 %v208
    %662 = vmatmul.f32.gmra.mxu0 %v578
    %v663 = vpop.f32.mrf.mxu0
    %v664 = vadd.f32 0.0, %v663
    %665 = vdwg.mxu0
    %v666 = vadd.f32 %v582, %v604
    %v667 = vadd.f32 %v583, %v624
    %v668 = vadd.f32 %v584, %v644
    %v669 = vadd.f32 %v585, %v664
    %v670 = vxor.u32 %v666, 2147483648
    %v671 = vmul.f32 %v670, 1.442695
    %v672 = vpow.pop %v671
    %v673 = vadd.f32 %v672, 1.0
    %v674 = vrcp.pop %v673
    %v675 = vmul.f32 %v673, %v674
    %v676 = vsub.f32 1.0, %v675
    %v677 = vmul.f32 %v674, %v676
    %v678 = vadd.f32 %v674, %v677
    %vm679 = vweird.f32 %v673
    %vm680 = vweird.f32 %v674
    %vm681 = vmor %vm679, %vm680
    %v682 = vsel %vm681, %v674, %v678
    %v683 = vand.u32 2147483647, %v673
    %vm684 = vcmp.eq.f32.partialorder %v683, 8.507059e+37
    %v685 = vand.u32 %v673, 2147483648
    %v686 = vor.u32 1.1754944e-38, %v685
    %v687 = vsel %vm684, %v686, %v682
    %v688 = vmul.f32 1.0, %v687
    %v689 = vxor.u32 %v667, 2147483648
    %v690 = vmul.f32 %v689, 1.442695
    %v691 = vpow.pop %v690
    %v692 = vadd.f32 %v691, 1.0
    %v693 = vrcp.pop %v692
    %v694 = vmul.f32 %v692, %v693
    %v695 = vsub.f32 1.0, %v694
    %v696 = vmul.f32 %v693, %v695
    %v697 = vadd.f32 %v693, %v696
    %vm698 = vweird.f32 %v692
    %vm699 = vweird.f32 %v693
    %vm700 = vmor %vm698, %vm699
    %v701 = vsel %vm700, %v693, %v697
    %v702 = vand.u32 2147483647, %v692
    %vm703 = vcmp.eq.f32.partialorder %v702, 8.507059e+37
    %v704 = vand.u32 %v692, 2147483648
    %v705 = vor.u32 1.1754944e-38, %v704
    %v706 = vsel %vm703, %v705, %v701
    %v707 = vmul.f32 1.0, %v706
    %v708 = vtanh.pop %v668
    %v709 = vxor.u32 %v669, 2147483648
    %v710 = vmul.f32 %v709, 1.442695
    %v711 = vpow.pop %v710
    %v712 = vadd.f32 %v711, 1.0
    %v713 = vrcp.pop %v712
    %v714 = vmul.f32 %v712, %v713
    %v715 = vsub.f32 1.0, %v714
    %v716 = vmul.f32 %v713, %v715
    %v717 = vadd.f32 %v713, %v716
    %vm718 = vweird.f32 %v712
    %vm719 = vweird.f32 %v713
    %vm720 = vmor %vm718, %vm719
    %v721 = vsel %vm720, %v713, %v717
    %v722 = vand.u32 2147483647, %v712
    %vm723 = vcmp.eq.f32.partialorder %v722, 8.507059e+37
    %v724 = vand.u32 %v712, 2147483648
    %v725 = vor.u32 1.1754944e-38, %v724
    %v726 = vsel %vm723, %v725, %v721
    %v727 = vmul.f32 1.0, %v726
    %v728 = vmul.f32 %v707, %v576
    %v729 = vmul.f32 %v688, %v708
    %v730 = vadd.f32 %v728, %v729
    %v731 = vtanh.pop %v730
    %v732 = vmul.f32 %v727, %v731
    %s733 = smul.u32 3, 4
    %s734 = smul.addr %s733, 8
    %s735 = scalar_lea.vmem [#allocation2], %s734
    %v736 = vld [vmem:[%s735] sm:$0xff]
    %v737 = vld [vmem:[%s735 + $0x8] sm:$0xff]
    %v738 = vld [vmem:[%s735 + $0x10] sm:$0xff]
    %v739 = vld [vmem:[%s735 + $0x18] sm:$0xff]
    %740 = vmatpush.msra.mxu0 %v265
    %741 = vmatpush.msra.mxu0 %v261
    %742 = vmatpush.msra.mxu0 %v257
    %743 = vmatpush.msra.mxu0 %v253
    %744 = vmatpush.msra.mxu0 %v249
    %745 = vmatpush.msra.mxu0 %v245
    %746 = vmatpush.msra.mxu0 %v241
    %747 = vmatpush.msra.mxu0 %v237
    %748 = vmatpush.msra.mxu0 %v233
    %749 = vmatpush.msra.mxu0 %v229
    %750 = vmatpush.msra.mxu0 %v225
    %751 = vmatpush.msra.mxu0 %v221
    %752 = vmatpush.msra.mxu0 %v217
    %753 = vmatpush.msra.mxu0 %v213
    %754 = vmatpush.msra.mxu0 %v209
    %755 = vmatpush.msra.mxu0 %v205
    %756 = vmatmul.f32.gmra.mxu0 %v732
    %v757 = vpop.f32.mrf.mxu0
    %v758 = vadd.f32 0.0, %v757
    %759 = vdwg.mxu0
    %760 = vmatpush.msra.mxu0 %v266
    %761 = vmatpush.msra.mxu0 %v262
    %762 = vmatpush.msra.mxu0 %v258
    %763 = vmatpush.msra.mxu0 %v254
    %764 = vmatpush.msra.mxu0 %v250
    %765 = vmatpush.msra.mxu0 %v246
    %766 = vmatpush.msra.mxu0 %v242
    %767 = vmatpush.msra.mxu0 %v238
    %768 = vmatpush.msra.mxu0 %v234
    %769 = vmatpush.msra.mxu0 %v230
    %770 = vmatpush.msra.mxu0 %v226
    %771 = vmatpush.msra.mxu0 %v222
    %772 = vmatpush.msra.mxu0 %v218
    %773 = vmatpush.msra.mxu0 %v214
    %774 = vmatpush.msra.mxu0 %v210
    %775 = vmatpush.msra.mxu0 %v206
    %776 = vmatmul.f32.gmra.mxu0 %v732
    %v777 = vpop.f32.mrf.mxu0
    %v778 = vadd.f32 0.0, %v777
    %779 = vdwg.mxu0
    %780 = vmatpush.msra.mxu0 %v267
    %781 = vmatpush.msra.mxu0 %v263
    %782 = vmatpush.msra.mxu0 %v259
    %783 = vmatpush.msra.mxu0 %v255
    %784 = vmatpush.msra.mxu0 %v251
    %785 = vmatpush.msra.mxu0 %v247
    %786 = vmatpush.msra.mxu0 %v243
    %787 = vmatpush.msra.mxu0 %v239
    %788 = vmatpush.msra.mxu0 %v235
    %789 = vmatpush.msra.mxu0 %v231
    %790 = vmatpush.msra.mxu0 %v227
    %791 = vmatpush.msra.mxu0 %v223
    %792 = vmatpush.msra.mxu0 %v219
    %793 = vmatpush.msra.mxu0 %v215
    %794 = vmatpush.msra.mxu0 %v211
    %795 = vmatpush.msra.mxu0 %v207
    %796 = vmatmul.f32.gmra.mxu0 %v732
    %v797 = vpop.f32.mrf.mxu0
    %v798 = vadd.f32 0.0, %v797
    %799 = vdwg.mxu0
    %800 = vmatpush.msra.mxu0 %v268
    %801 = vmatpush.msra.mxu0 %v264
    %802 = vmatpush.msra.mxu0 %v260
    %803 = vmatpush.msra.mxu0 %v256
    %804 = vmatpush.msra.mxu0 %v252
    %805 = vmatpush.msra.mxu0 %v248
    %806 = vmatpush.msra.mxu0 %v244
    %807 = vmatpush.msra.mxu0 %v240
    %808 = vmatpush.msra.mxu0 %v236
    %809 = vmatpush.msra.mxu0 %v232
    %810 = vmatpush.msra.mxu0 %v228
    %811 = vmatpush.msra.mxu0 %v224
    %812 = vmatpush.msra.mxu0 %v220
    %813 = vmatpush.msra.mxu0 %v216
    %814 = vmatpush.msra.mxu0 %v212
    %815 = vmatpush.msra.mxu0 %v208
    %816 = vmatmul.f32.gmra.mxu0 %v732
    %v817 = vpop.f32.mrf.mxu0
    %v818 = vadd.f32 0.0, %v817
    %819 = vdwg.mxu0
    %v820 = vadd.f32 %v736, %v758
    %v821 = vadd.f32 %v737, %v778
    %v822 = vadd.f32 %v738, %v798
    %v823 = vadd.f32 %v739, %v818
    %v824 = vxor.u32 %v820, 2147483648
    %v825 = vmul.f32 %v824, 1.442695
    %v826 = vpow.pop %v825
    %v827 = vadd.f32 %v826, 1.0
    %v828 = vrcp.pop %v827
    %v829 = vmul.f32 %v827, %v828
    %v830 = vsub.f32 1.0, %v829
    %v831 = vmul.f32 %v828, %v830
    %v832 = vadd.f32 %v828, %v831
    %vm833 = vweird.f32 %v827
    %vm834 = vweird.f32 %v828
    %vm835 = vmor %vm833, %vm834
    %v836 = vsel %vm835, %v828, %v832
    %v837 = vand.u32 2147483647, %v827
    %vm838 = vcmp.eq.f32.partialorder %v837, 8.507059e+37
    %v839 = vand.u32 %v827, 2147483648
    %v840 = vor.u32 1.1754944e-38, %v839
    %v841 = vsel %vm838, %v840, %v836
    %v842 = vmul.f32 1.0, %v841
    %v843 = vxor.u32 %v821, 2147483648
    %v844 = vmul.f32 %v843, 1.442695
    %v845 = vpow.pop %v844
    %v846 = vadd.f32 %v845, 1.0
    %v847 = vrcp.pop %v846
    %v848 = vmul.f32 %v846, %v847
    %v849 = vsub.f32 1.0, %v848
    %v850 = vmul.f32 %v847, %v849
    %v851 = vadd.f32 %v847, %v850
    %vm852 = vweird.f32 %v846
    %vm853 = vweird.f32 %v847
    %vm854 = vmor %vm852, %vm853
    %v855 = vsel %vm854, %v847, %v851
    %v856 = vand.u32 2147483647, %v846
    %vm857 = vcmp.eq.f32.partialorder %v856, 8.507059e+37
    %v858 = vand.u32 %v846, 2147483648
    %v859 = vor.u32 1.1754944e-38, %v858
    %v860 = vsel %vm857, %v859, %v855
    %v861 = vmul.f32 1.0, %v860
    %v862 = vtanh.pop %v822
    %v863 = vxor.u32 %v823, 2147483648
    %v864 = vmul.f32 %v863, 1.442695
    %v865 = vpow.pop %v864
    %v866 = vadd.f32 %v865, 1.0
    %v867 = vrcp.pop %v866
    %v868 = vmul.f32 %v866, %v867
    %v869 = vsub.f32 1.0, %v868
    %v870 = vmul.f32 %v867, %v869
    %v871 = vadd.f32 %v867, %v870
    %vm872 = vweird.f32 %v866
    %vm873 = vweird.f32 %v867
    %vm874 = vmor %vm872, %vm873
    %v875 = vsel %vm874, %v867, %v871
    %v876 = vand.u32 2147483647, %v866
    %vm877 = vcmp.eq.f32.partialorder %v876, 8.507059e+37
    %v878 = vand.u32 %v866, 2147483648
    %v879 = vor.u32 1.1754944e-38, %v878
    %v880 = vsel %vm877, %v879, %v875
    %v881 = vmul.f32 1.0, %v880
    %v882 = vmul.f32 %v861, %v730
    %v883 = vmul.f32 %v842, %v862
    %v884 = vadd.f32 %v882, %v883
    %v885 = vtanh.pop %v884
    %v886 = vmul.f32 %v881, %v885
    %s887 = smul.u32 4, 4
    %s888 = smul.addr %s887, 8
    %s889 = scalar_lea.vmem [#allocation2], %s888
    %v890 = vld [vmem:[%s889] sm:$0xff]
    %v891 = vld [vmem:[%s889 + $0x8] sm:$0xff]
    %v892 = vld [vmem:[%s889 + $0x10] sm:$0xff]
    %v893 = vld [vmem:[%s889 + $0x18] sm:$0xff]
    %894 = vmatpush.msra.mxu0 %v265
    %895 = vmatpush.msra.mxu0 %v261
    %896 = vmatpush.msra.mxu0 %v257
    %897 = vmatpush.msra.mxu0 %v253
    %898 = vmatpush.msra.mxu0 %v249
    %899 = vmatpush.msra.mxu0 %v245
    %900 = vmatpush.msra.mxu0 %v241
    %901 = vmatpush.msra.mxu0 %v237
    %902 = vmatpush.msra.mxu0 %v233
    %903 = vmatpush.msra.mxu0 %v229
    %904 = vmatpush.msra.mxu0 %v225
    %905 = vmatpush.msra.mxu0 %v221
    %906 = vmatpush.msra.mxu0 %v217
    %907 = vmatpush.msra.mxu0 %v213
    %908 = vmatpush.msra.mxu0 %v209
    %909 = vmatpush.msra.mxu0 %v205
    %910 = vmatmul.f32.gmra.mxu0 %v886
    %v911 = vpop.f32.mrf.mxu0
    %v912 = vadd.f32 0.0, %v911
    %913 = vdwg.mxu0
    %914 = vmatpush.msra.mxu0 %v266
    %915 = vmatpush.msra.mxu0 %v262
    %916 = vmatpush.msra.mxu0 %v258
    %917 = vmatpush.msra.mxu0 %v254
    %918 = vmatpush.msra.mxu0 %v250
    %919 = vmatpush.msra.mxu0 %v246
    %920 = vmatpush.msra.mxu0 %v242
    %921 = vmatpush.msra.mxu0 %v238
    %922 = vmatpush.msra.mxu0 %v234
    %923 = vmatpush.msra.mxu0 %v230
    %924 = vmatpush.msra.mxu0 %v226
    %925 = vmatpush.msra.mxu0 %v222
    %926 = vmatpush.msra.mxu0 %v218
    %927 = vmatpush.msra.mxu0 %v214
    %928 = vmatpush.msra.mxu0 %v210
    %929 = vmatpush.msra.mxu0 %v206
    %930 = vmatmul.f32.gmra.mxu0 %v886
    %v931 = vpop.f32.mrf.mxu0
    %v932 = vadd.f32 0.0, %v931
    %933 = vdwg.mxu0
    %934 = vmatpush.msra.mxu0 %v267
    %935 = vmatpush.msra.mxu0 %v263
    %936 = vmatpush.msra.mxu0 %v259
    %937 = vmatpush.msra.mxu0 %v255
    %938 = vmatpush.msra.mxu0 %v251
    %939 = vmatpush.msra.mxu0 %v247
    %940 = vmatpush.msra.mxu0 %v243
    %941 = vmatpush.msra.mxu0 %v239
    %942 = vmatpush.msra.mxu0 %v235
    %943 = vmatpush.msra.mxu0 %v231
    %944 = vmatpush.msra.mxu0 %v227
    %945 = vmatpush.msra.mxu0 %v223
    %946 = vmatpush.msra.mxu0 %v219
    %947 = vmatpush.msra.mxu0 %v215
    %948 = vmatpush.msra.mxu0 %v211
    %949 = vmatpush.msra.mxu0 %v207
    %950 = vmatmul.f32.gmra.mxu0 %v886
    %v951 = vpop.f32.mrf.mxu0
    %v952 = vadd.f32 0.0, %v951
    %953 = vdwg.mxu0
    %954 = vmatpush.msra.mxu0 %v268
    %955 = vmatpush.msra.mxu0 %v264
    %956 = vmatpush.msra.mxu0 %v260
    %957 = vmatpush.msra.mxu0 %v256
    %958 = vmatpush.msra.mxu0 %v252
    %959 = vmatpush.msra.mxu0 %v248
    %960 = vmatpush.msra.mxu0 %v244
    %961 = vmatpush.msra.mxu0 %v240
    %962 = vmatpush.msra.mxu0 %v236
    %963 = vmatpush.msra.mxu0 %v232
    %964 = vmatpush.msra.mxu0 %v228
    %965 = vmatpush.msra.mxu0 %v224
    %966 = vmatpush.msra.mxu0 %v220
    %967 = vmatpush.msra.mxu0 %v216
    %968 = vmatpush.msra.mxu0 %v212
    %969 = vmatpush.msra.mxu0 %v208
    %970 = vmatmul.f32.gmra.mxu0 %v886
    %v971 = vpop.f32.mrf.mxu0
    %v972 = vadd.f32 0.0, %v971
    %973 = vdwg.mxu0
    %v974 = vadd.f32 %v890, %v912
    %v975 = vadd.f32 %v891, %v932
    %v976 = vadd.f32 %v892, %v952
    %v977 = vadd.f32 %v893, %v972
    %v978 = vxor.u32 %v974, 2147483648
    %v979 = vmul.f32 %v978, 1.442695
    %v980 = vpow.pop %v979
    %v981 = vadd.f32 %v980, 1.0
    %v982 = vrcp.pop %v981
    %v983 = vmul.f32 %v981, %v982
    %v984 = vsub.f32 1.0, %v983
    %v985 = vmul.f32 %v982, %v984
    %v986 = vadd.f32 %v982, %v985
    %vm987 = vweird.f32 %v981
    %vm988 = vweird.f32 %v982
    %vm989 = vmor %vm987, %vm988
    %v990 = vsel %vm989, %v982, %v986
    %v991 = vand.u32 2147483647, %v981
    %vm992 = vcmp.eq.f32.partialorder %v991, 8.507059e+37
    %v993 = vand.u32 %v981, 2147483648
    %v994 = vor.u32 1.1754944e-38, %v993
    %v995 = vsel %vm992, %v994, %v990
    %v996 = vmul.f32 1.0, %v995
    %v997 = vxor.u32 %v975, 2147483648
    %v998 = vmul.f32 %v997, 1.442695
    %v999 = vpow.pop %v998
    %v1000 = vadd.f32 %v999, 1.0
    %v1001 = vrcp.pop %v1000
    %v1002 = vmul.f32 %v1000, %v1001
    %v1003 = vsub.f32 1.0, %v1002
    %v1004 = vmul.f32 %v1001, %v1003
    %v1005 = vadd.f32 %v1001, %v1004
    %vm1006 = vweird.f32 %v1000
    %vm1007 = vweird.f32 %v1001
    %vm1008 = vmor %vm1006, %vm1007
    %v1009 = vsel %vm1008, %v1001, %v1005
    %v1010 = vand.u32 2147483647, %v1000
    %vm1011 = vcmp.eq.f32.partialorder %v1010, 8.507059e+37
    %v1012 = vand.u32 %v1000, 2147483648
    %v1013 = vor.u32 1.1754944e-38, %v1012
    %v1014 = vsel %vm1011, %v1013, %v1009
    %v1015 = vmul.f32 1.0, %v1014
    %v1016 = vtanh.pop %v976
    %v1017 = vxor.u32 %v977, 2147483648
    %v1018 = vmul.f32 %v1017, 1.442695
    %v1019 = vpow.pop %v1018
    %v1020 = vadd.f32 %v1019, 1.0
    %v1021 = vrcp.pop %v1020
    %v1022 = vmul.f32 %v1020, %v1021
    %v1023 = vsub.f32 1.0, %v1022
    %v1024 = vmul.f32 %v1021, %v1023
    %v1025 = vadd.f32 %v1021, %v1024
    %vm1026 = vweird.f32 %v1020
    %vm1027 = vweird.f32 %v1021
    %vm1028 = vmor %vm1026, %vm1027
    %v1029 = vsel %vm1028, %v1021, %v1025
    %v1030 = vand.u32 2147483647, %v1020
    %vm1031 = vcmp.eq.f32.partialorder %v1030, 8.507059e+37
    %v1032 = vand.u32 %v1020, 2147483648
    %v1033 = vor.u32 1.1754944e-38, %v1032
    %v1034 = vsel %vm1031, %v1033, %v1029
    %v1035 = vmul.f32 1.0, %v1034
    %v1036 = vmul.f32 %v1015, %v884
    %v1037 = vmul.f32 %v996, %v1016
    %v1038 = vadd.f32 %v1036, %v1037
    %v1039 = vtanh.pop %v1038
    %v1040 = vmul.f32 %v1035, %v1039
    %s1041 = smul.u32 5, 4
    %s1042 = smul.addr %s1041, 8
    %s1043 = scalar_lea.vmem [#allocation2], %s1042
    %v1044 = vld [vmem:[%s1043] sm:$0xff]
    %v1045 = vld [vmem:[%s1043 + $0x8] sm:$0xff]
    %v1046 = vld [vmem:[%s1043 + $0x10] sm:$0xff]
    %v1047 = vld [vmem:[%s1043 + $0x18] sm:$0xff]
    %1048 = vmatpush.msra.mxu0 %v265
    %1049 = vmatpush.msra.mxu0 %v261
    %1050 = vmatpush.msra.mxu0 %v257
    %1051 = vmatpush.msra.mxu0 %v253
    %1052 = vmatpush.msra.mxu0 %v249
    %1053 = vmatpush.msra.mxu0 %v245
    %1054 = vmatpush.msra.mxu0 %v241
    %1055 = vmatpush.msra.mxu0 %v237
    %1056 = vmatpush.msra.mxu0 %v233
    %1057 = vmatpush.msra.mxu0 %v229
    %1058 = vmatpush.msra.mxu0 %v225
    %1059 = vmatpush.msra.mxu0 %v221
    %1060 = vmatpush.msra.mxu0 %v217
    %1061 = vmatpush.msra.mxu0 %v213
    %1062 = vmatpush.msra.mxu0 %v209
    %1063 = vmatpush.msra.mxu0 %v205
    %1064 = vmatmul.f32.gmra.mxu0 %v1040
    %v1065 = vpop.f32.mrf.mxu0
    %v1066 = vadd.f32 0.0, %v1065
    %1067 = vdwg.mxu0
    %1068 = vmatpush.msra.mxu0 %v266
    %1069 = vmatpush.msra.mxu0 %v262
    %1070 = vmatpush.msra.mxu0 %v258
    %1071 = vmatpush.msra.mxu0 %v254
    %1072 = vmatpush.msra.mxu0 %v250
    %1073 = vmatpush.msra.mxu0 %v246
    %1074 = vmatpush.msra.mxu0 %v242
    %1075 = vmatpush.msra.mxu0 %v238
    %1076 = vmatpush.msra.mxu0 %v234
    %1077 = vmatpush.msra.mxu0 %v230
    %1078 = vmatpush.msra.mxu0 %v226
    %1079 = vmatpush.msra.mxu0 %v222
    %1080 = vmatpush.msra.mxu0 %v218
    %1081 = vmatpush.msra.mxu0 %v214
    %1082 = vmatpush.msra.mxu0 %v210
    %1083 = vmatpush.msra.mxu0 %v206
    %1084 = vmatmul.f32.gmra.mxu0 %v1040
    %v1085 = vpop.f32.mrf.mxu0
    %v1086 = vadd.f32 0.0, %v1085
    %1087 = vdwg.mxu0
    %1088 = vmatpush.msra.mxu0 %v267
    %1089 = vmatpush.msra.mxu0 %v263
    %1090 = vmatpush.msra.mxu0 %v259
    %1091 = vmatpush.msra.mxu0 %v255
    %1092 = vmatpush.msra.mxu0 %v251
    %1093 = vmatpush.msra.mxu0 %v247
    %1094 = vmatpush.msra.mxu0 %v243
    %1095 = vmatpush.msra.mxu0 %v239
    %1096 = vmatpush.msra.mxu0 %v235
    %1097 = vmatpush.msra.mxu0 %v231
    %1098 = vmatpush.msra.mxu0 %v227
    %1099 = vmatpush.msra.mxu0 %v223
    %1100 = vmatpush.msra.mxu0 %v219
    %1101 = vmatpush.msra.mxu0 %v215
    %1102 = vmatpush.msra.mxu0 %v211
    %1103 = vmatpush.msra.mxu0 %v207
    %1104 = vmatmul.f32.gmra.mxu0 %v1040
    %v1105 = vpop.f32.mrf.mxu0
    %v1106 = vadd.f32 0.0, %v1105
    %1107 = vdwg.mxu0
    %1108 = vmatpush.msra.mxu0 %v268
    %1109 = vmatpush.msra.mxu0 %v264
    %1110 = vmatpush.msra.mxu0 %v260
    %1111 = vmatpush.msra.mxu0 %v256
    %1112 = vmatpush.msra.mxu0 %v252
    %1113 = vmatpush.msra.mxu0 %v248
    %1114 = vmatpush.msra.mxu0 %v244
    %1115 = vmatpush.msra.mxu0 %v240
    %1116 = vmatpush.msra.mxu0 %v236
    %1117 = vmatpush.msra.mxu0 %v232
    %1118 = vmatpush.msra.mxu0 %v228
    %1119 = vmatpush.msra.mxu0 %v224
    %1120 = vmatpush.msra.mxu0 %v220
    %1121 = vmatpush.msra.mxu0 %v216
    %1122 = vmatpush.msra.mxu0 %v212
    %1123 = vmatpush.msra.mxu0 %v208
    %1124 = vmatmul.f32.gmra.mxu0 %v1040
    %v1125 = vpop.f32.mrf.mxu0
    %v1126 = vadd.f32 0.0, %v1125
    %1127 = vdwg.mxu0
    %v1128 = vadd.f32 %v1044, %v1066
    %v1129 = vadd.f32 %v1045, %v1086
    %v1130 = vadd.f32 %v1046, %v1106
    %v1131 = vadd.f32 %v1047, %v1126
    %v1132 = vxor.u32 %v1128, 2147483648
    %v1133 = vmul.f32 %v1132, 1.442695
    %v1134 = vpow.pop %v1133
    %v1135 = vadd.f32 %v1134, 1.0
    %v1136 = vrcp.pop %v1135
    %v1137 = vmul.f32 %v1135, %v1136
    %v1138 = vsub.f32 1.0, %v1137
    %v1139 = vmul.f32 %v1136, %v1138
    %v1140 = vadd.f32 %v1136, %v1139
    %vm1141 = vweird.f32 %v1135
    %vm1142 = vweird.f32 %v1136
    %vm1143 = vmor %vm1141, %vm1142
    %v1144 = vsel %vm1143, %v1136, %v1140
    %v1145 = vand.u32 2147483647, %v1135
    %vm1146 = vcmp.eq.f32.partialorder %v1145, 8.507059e+37
    %v1147 = vand.u32 %v1135, 2147483648
    %v1148 = vor.u32 1.1754944e-38, %v1147
    %v1149 = vsel %vm1146, %v1148, %v1144
    %v1150 = vmul.f32 1.0, %v1149
    %v1151 = vxor.u32 %v1129, 2147483648
    %v1152 = vmul.f32 %v1151, 1.442695
    %v1153 = vpow.pop %v1152
    %v1154 = vadd.f32 %v1153, 1.0
    %v1155 = vrcp.pop %v1154
    %v1156 = vmul.f32 %v1154, %v1155
    %v1157 = vsub.f32 1.0, %v1156
    %v1158 = vmul.f32 %v1155, %v1157
    %v1159 = vadd.f32 %v1155, %v1158
    %vm1160 = vweird.f32 %v1154
    %vm1161 = vweird.f32 %v1155
    %vm1162 = vmor %vm1160, %vm1161
    %v1163 = vsel %vm1162, %v1155, %v1159
    %v1164 = vand.u32 2147483647, %v1154
    %vm1165 = vcmp.eq.f32.partialorder %v1164, 8.507059e+37
    %v1166 = vand.u32 %v1154, 2147483648
    %v1167 = vor.u32 1.1754944e-38, %v1166
    %v1168 = vsel %vm1165, %v1167, %v1163
    %v1169 = vmul.f32 1.0, %v1168
    %v1170 = vtanh.pop %v1130
    %v1171 = vxor.u32 %v1131, 2147483648
    %v1172 = vmul.f32 %v1171, 1.442695
    %v1173 = vpow.pop %v1172
    %v1174 = vadd.f32 %v1173, 1.0
    %v1175 = vrcp.pop %v1174
    %v1176 = vmul.f32 %v1174, %v1175
    %v1177 = vsub.f32 1.0, %v1176
    %v1178 = vmul.f32 %v1175, %v1177
    %v1179 = vadd.f32 %v1175, %v1178
    %vm1180 = vweird.f32 %v1174
    %vm1181 = vweird.f32 %v1175
    %vm1182 = vmor %vm1180, %vm1181
    %v1183 = vsel %vm1182, %v1175, %v1179
    %v1184 = vand.u32 2147483647, %v1174
    %vm1185 = vcmp.eq.f32.partialorder %v1184, 8.507059e+37
    %v1186 = vand.u32 %v1174, 2147483648
    %v1187 = vor.u32 1.1754944e-38, %v1186
    %v1188 = vsel %vm1185, %v1187, %v1183
    %v1189 = vmul.f32 1.0, %v1188
    %v1190 = vmul.f32 %v1169, %v1038
    %v1191 = vmul.f32 %v1150, %v1170
    %v1192 = vadd.f32 %v1190, %v1191
    %v1193 = vtanh.pop %v1192
    %v1194 = vmul.f32 %v1189, %v1193
    %s1195 = smul.u32 6, 4
    %s1196 = smul.addr %s1195, 8
    %s1197 = scalar_lea.vmem [#allocation2], %s1196
    %v1198 = vld [vmem:[%s1197] sm:$0xff]
    %v1199 = vld [vmem:[%s1197 + $0x8] sm:$0xff]
    %v1200 = vld [vmem:[%s1197 + $0x10] sm:$0xff]
    %v1201 = vld [vmem:[%s1197 + $0x18] sm:$0xff]
    %1202 = vmatpush.msra.mxu0 %v265
    %1203 = vmatpush.msra.mxu0 %v261
    %1204 = vmatpush.msra.mxu0 %v257
    %1205 = vmatpush.msra.mxu0 %v253
    %1206 = vmatpush.msra.mxu0 %v249
    %1207 = vmatpush.msra.mxu0 %v245
    %1208 = vmatpush.msra.mxu0 %v241
    %1209 = vmatpush.msra.mxu0 %v237
    %1210 = vmatpush.msra.mxu0 %v233
    %1211 = vmatpush.msra.mxu0 %v229
    %1212 = vmatpush.msra.mxu0 %v225
    %1213 = vmatpush.msra.mxu0 %v221
    %1214 = vmatpush.msra.mxu0 %v217
    %1215 = vmatpush.msra.mxu0 %v213
    %1216 = vmatpush.msra.mxu0 %v209
    %1217 = vmatpush.msra.mxu0 %v205
    %1218 = vmatmul.f32.gmra.mxu0 %v1194
    %v1219 = vpop.f32.mrf.mxu0
    %v1220 = vadd.f32 0.0, %v1219
    %1221 = vdwg.mxu0
    %1222 = vmatpush.msra.mxu0 %v266
    %1223 = vmatpush.msra.mxu0 %v262
    %1224 = vmatpush.msra.mxu0 %v258
    %1225 = vmatpush.msra.mxu0 %v254
    %1226 = vmatpush.msra.mxu0 %v250
    %1227 = vmatpush.msra.mxu0 %v246
    %1228 = vmatpush.msra.mxu0 %v242
    %1229 = vmatpush.msra.mxu0 %v238
    %1230 = vmatpush.msra.mxu0 %v234
    %1231 = vmatpush.msra.mxu0 %v230
    %1232 = vmatpush.msra.mxu0 %v226
    %1233 = vmatpush.msra.mxu0 %v222
    %1234 = vmatpush.msra.mxu0 %v218
    %1235 = vmatpush.msra.mxu0 %v214
    %1236 = vmatpush.msra.mxu0 %v210
    %1237 = vmatpush.msra.mxu0 %v206
    %1238 = vmatmul.f32.gmra.mxu0 %v1194
    %v1239 = vpop.f32.mrf.mxu0
    %v1240 = vadd.f32 0.0, %v1239
    %1241 = vdwg.mxu0
    %1242 = vmatpush.msra.mxu0 %v267
    %1243 = vmatpush.msra.mxu0 %v263
    %1244 = vmatpush.msra.mxu0 %v259
    %1245 = vmatpush.msra.mxu0 %v255
    %1246 = vmatpush.msra.mxu0 %v251
    %1247 = vmatpush.msra.mxu0 %v247
    %1248 = vmatpush.msra.mxu0 %v243
    %1249 = vmatpush.msra.mxu0 %v239
    %1250 = vmatpush.msra.mxu0 %v235
    %1251 = vmatpush.msra.mxu0 %v231
    %1252 = vmatpush.msra.mxu0 %v227
    %1253 = vmatpush.msra.mxu0 %v223
    %1254 = vmatpush.msra.mxu0 %v219
    %1255 = vmatpush.msra.mxu0 %v215
    %1256 = vmatpush.msra.mxu0 %v211
    %1257 = vmatpush.msra.mxu0 %v207
    %1258 = vmatmul.f32.gmra.mxu0 %v1194
    %v1259 = vpop.f32.mrf.mxu0
    %v1260 = vadd.f32 0.0, %v1259
    %1261 = vdwg.mxu0
    %1262 = vmatpush.msra.mxu0 %v268
    %1263 = vmatpush.msra.mxu0 %v264
    %1264 = vmatpush.msra.mxu0 %v260
    %1265 = vmatpush.msra.mxu0 %v256
    %1266 = vmatpush.msra.mxu0 %v252
    %1267 = vmatpush.msra.mxu0 %v248
    %1268 = vmatpush.msra.mxu0 %v244
    %1269 = vmatpush.msra.mxu0 %v240
    %1270 = vmatpush.msra.mxu0 %v236
    %1271 = vmatpush.msra.mxu0 %v232
    %1272 = vmatpush.msra.mxu0 %v228
    %1273 = vmatpush.msra.mxu0 %v224
    %1274 = vmatpush.msra.mxu0 %v220
    %1275 = vmatpush.msra.mxu0 %v216
    %1276 = vmatpush.msra.mxu0 %v212
    %1277 = vmatpush.msra.mxu0 %v208
    %1278 = vmatmul.f32.gmra.mxu0 %v1194
    %v1279 = vpop.f32.mrf.mxu0
    %v1280 = vadd.f32 0.0, %v1279
    %1281 = vdwg.mxu0
    %v1282 = vadd.f32 %v1198, %v1220
    %v1283 = vadd.f32 %v1199, %v1240
    %v1284 = vadd.f32 %v1200, %v1260
    %v1285 = vadd.f32 %v1201, %v1280
    %v1286 = vxor.u32 %v1282, 2147483648
    %v1287 = vmul.f32 %v1286, 1.442695
    %v1288 = vpow.pop %v1287
    %v1289 = vadd.f32 %v1288, 1.0
    %v1290 = vrcp.pop %v1289
    %v1291 = vmul.f32 %v1289, %v1290
    %v1292 = vsub.f32 1.0, %v1291
    %v1293 = vmul.f32 %v1290, %v1292
    %v1294 = vadd.f32 %v1290, %v1293
    %vm1295 = vweird.f32 %v1289
    %vm1296 = vweird.f32 %v1290
    %vm1297 = vmor %vm1295, %vm1296
    %v1298 = vsel %vm1297, %v1290, %v1294
    %v1299 = vand.u32 2147483647, %v1289
    %vm1300 = vcmp.eq.f32.partialorder %v1299, 8.507059e+37
    %v1301 = vand.u32 %v1289, 2147483648
    %v1302 = vor.u32 1.1754944e-38, %v1301
    %v1303 = vsel %vm1300, %v1302, %v1298
    %v1304 = vmul.f32 1.0, %v1303
    %v1305 = vxor.u32 %v1283, 2147483648
    %v1306 = vmul.f32 %v1305, 1.442695
    %v1307 = vpow.pop %v1306
    %v1308 = vadd.f32 %v1307, 1.0
    %v1309 = vrcp.pop %v1308
    %v1310 = vmul.f32 %v1308, %v1309
    %v1311 = vsub.f32 1.0, %v1310
    %v1312 = vmul.f32 %v1309, %v1311
    %v1313 = vadd.f32 %v1309, %v1312
    %vm1314 = vweird.f32 %v1308
    %vm1315 = vweird.f32 %v1309
    %vm1316 = vmor %vm1314, %vm1315
    %v1317 = vsel %vm1316, %v1309, %v1313
    %v1318 = vand.u32 2147483647, %v1308
    %vm1319 = vcmp.eq.f32.partialorder %v1318, 8.507059e+37
    %v1320 = vand.u32 %v1308, 2147483648
    %v1321 = vor.u32 1.1754944e-38, %v1320
    %v1322 = vsel %vm1319, %v1321, %v1317
    %v1323 = vmul.f32 1.0, %v1322
    %v1324 = vtanh.pop %v1284
    %v1325 = vxor.u32 %v1285, 2147483648
    %v1326 = vmul.f32 %v1325, 1.442695
    %v1327 = vpow.pop %v1326
    %v1328 = vadd.f32 %v1327, 1.0
    %v1329 = vrcp.pop %v1328
    %v1330 = vmul.f32 %v1328, %v1329
    %v1331 = vsub.f32 1.0, %v1330
    %v1332 = vmul.f32 %v1329, %v1331
    %v1333 = vadd.f32 %v1329, %v1332
    %vm1334 = vweird.f32 %v1328
    %vm1335 = vweird.f32 %v1329
    %vm1336 = vmor %vm1334, %vm1335
    %v1337 = vsel %vm1336, %v1329, %v1333
    %v1338 = vand.u32 2147483647, %v1328
    %vm1339 = vcmp.eq.f32.partialorder %v1338, 8.507059e+37
    %v1340 = vand.u32 %v1328, 2147483648
    %v1341 = vor.u32 1.1754944e-38, %v1340
    %v1342 = vsel %vm1339, %v1341, %v1337
    %v1343 = vmul.f32 1.0, %v1342
    %v1344 = vmul.f32 %v1323, %v1192
    %v1345 = vmul.f32 %v1304, %v1324
    %v1346 = vadd.f32 %v1344, %v1345
    %v1347 = vtanh.pop %v1346
    %v1348 = vmul.f32 %v1343, %v1347
    %s1349 = smul.u32 7, 4
    %s1350 = smul.addr %s1349, 8
    %s1351 = scalar_lea.vmem [#allocation2], %s1350
    %v1352 = vld [vmem:[%s1351] sm:$0xff]
    %v1353 = vld [vmem:[%s1351 + $0x8] sm:$0xff]
    %v1354 = vld [vmem:[%s1351 + $0x10] sm:$0xff]
    %v1355 = vld [vmem:[%s1351 + $0x18] sm:$0xff]
    %1356 = vmatpush.msra.mxu0 %v265
    %1357 = vmatpush.msra.mxu0 %v261
    %1358 = vmatpush.msra.mxu0 %v257
    %1359 = vmatpush.msra.mxu0 %v253
    %1360 = vmatpush.msra.mxu0 %v249
    %1361 = vmatpush.msra.mxu0 %v245
    %1362 = vmatpush.msra.mxu0 %v241
    %1363 = vmatpush.msra.mxu0 %v237
    %1364 = vmatpush.msra.mxu0 %v233
    %1365 = vmatpush.msra.mxu0 %v229
    %1366 = vmatpush.msra.mxu0 %v225
    %1367 = vmatpush.msra.mxu0 %v221
    %1368 = vmatpush.msra.mxu0 %v217
    %1369 = vmatpush.msra.mxu0 %v213
    %1370 = vmatpush.msra.mxu0 %v209
    %1371 = vmatpush.msra.mxu0 %v205
    %1372 = vmatmul.f32.gmra.mxu0 %v1348
    %v1373 = vpop.f32.mrf.mxu0
    %v1374 = vadd.f32 0.0, %v1373
    %1375 = vdwg.mxu0
    %1376 = vmatpush.msra.mxu0 %v266
    %1377 = vmatpush.msra.mxu0 %v262
    %1378 = vmatpush.msra.mxu0 %v258
    %1379 = vmatpush.msra.mxu0 %v254
    %1380 = vmatpush.msra.mxu0 %v250
    %1381 = vmatpush.msra.mxu0 %v246
    %1382 = vmatpush.msra.mxu0 %v242
    %1383 = vmatpush.msra.mxu0 %v238
    %1384 = vmatpush.msra.mxu0 %v234
    %1385 = vmatpush.msra.mxu0 %v230
    %1386 = vmatpush.msra.mxu0 %v226
    %1387 = vmatpush.msra.mxu0 %v222
    %1388 = vmatpush.msra.mxu0 %v218
    %1389 = vmatpush.msra.mxu0 %v214
    %1390 = vmatpush.msra.mxu0 %v210
    %1391 = vmatpush.msra.mxu0 %v206
    %1392 = vmatmul.f32.gmra.mxu0 %v1348
    %v1393 = vpop.f32.mrf.mxu0
    %v1394 = vadd.f32 0.0, %v1393
    %1395 = vdwg.mxu0
    %1396 = vmatpush.msra.mxu0 %v267
    %1397 = vmatpush.msra.mxu0 %v263
    %1398 = vmatpush.msra.mxu0 %v259
    %1399 = vmatpush.msra.mxu0 %v255
    %1400 = vmatpush.msra.mxu0 %v251
    %1401 = vmatpush.msra.mxu0 %v247
    %1402 = vmatpush.msra.mxu0 %v243
    %1403 = vmatpush.msra.mxu0 %v239
    %1404 = vmatpush.msra.mxu0 %v235
    %1405 = vmatpush.msra.mxu0 %v231
    %1406 = vmatpush.msra.mxu0 %v227
    %1407 = vmatpush.msra.mxu0 %v223
    %1408 = vmatpush.msra.mxu0 %v219
    %1409 = vmatpush.msra.mxu0 %v215
    %1410 = vmatpush.msra.mxu0 %v211
    %1411 = vmatpush.msra.mxu0 %v207
    %1412 = vmatmul.f32.gmra.mxu0 %v1348
    %v1413 = vpop.f32.mrf.mxu0
    %v1414 = vadd.f32 0.0, %v1413
    %1415 = vdwg.mxu0
    %1416 = vmatpush.msra.mxu0 %v268
    %1417 = vmatpush.msra.mxu0 %v264
    %1418 = vmatpush.msra.mxu0 %v260
    %1419 = vmatpush.msra.mxu0 %v256
    %1420 = vmatpush.msra.mxu0 %v252
    %1421 = vmatpush.msra.mxu0 %v248
    %1422 = vmatpush.msra.mxu0 %v244
    %1423 = vmatpush.msra.mxu0 %v240
    %1424 = vmatpush.msra.mxu0 %v236
    %1425 = vmatpush.msra.mxu0 %v232
    %1426 = vmatpush.msra.mxu0 %v228
    %1427 = vmatpush.msra.mxu0 %v224
    %1428 = vmatpush.msra.mxu0 %v220
    %1429 = vmatpush.msra.mxu0 %v216
    %1430 = vmatpush.msra.mxu0 %v212
    %1431 = vmatpush.msra.mxu0 %v208
    %1432 = vmatmul.f32.gmra.mxu0 %v1348
    %v1433 = vpop.f32.mrf.mxu0
    %v1434 = vadd.f32 0.0, %v1433
    %1435 = vdwg.mxu0
    %v1436 = vadd.f32 %v1352, %v1374
    %v1437 = vadd.f32 %v1353, %v1394
    %v1438 = vadd.f32 %v1354, %v1414
    %v1439 = vadd.f32 %v1355, %v1434
    %v1440 = vxor.u32 %v1436, 2147483648
    %v1441 = vmul.f32 %v1440, 1.442695
    %v1442 = vpow.pop %v1441
    %v1443 = vadd.f32 %v1442, 1.0
    %v1444 = vrcp.pop %v1443
    %v1445 = vmul.f32 %v1443, %v1444
    %v1446 = vsub.f32 1.0, %v1445
    %v1447 = vmul.f32 %v1444, %v1446
    %v1448 = vadd.f32 %v1444, %v1447
    %vm1449 = vweird.f32 %v1443
    %vm1450 = vweird.f32 %v1444
    %vm1451 = vmor %vm1449, %vm1450
    %v1452 = vsel %vm1451, %v1444, %v1448
    %v1453 = vand.u32 2147483647, %v1443
    %vm1454 = vcmp.eq.f32.partialorder %v1453, 8.507059e+37
    %v1455 = vand.u32 %v1443, 2147483648
    %v1456 = vor.u32 1.1754944e-38, %v1455
    %v1457 = vsel %vm1454, %v1456, %v1452
    %v1458 = vmul.f32 1.0, %v1457
    %v1459 = vxor.u32 %v1437, 2147483648
    %v1460 = vmul.f32 %v1459, 1.442695
    %v1461 = vpow.pop %v1460
    %v1462 = vadd.f32 %v1461, 1.0
    %v1463 = vrcp.pop %v1462
    %v1464 = vmul.f32 %v1462, %v1463
    %v1465 = vsub.f32 1.0, %v1464
    %v1466 = vmul.f32 %v1463, %v1465
    %v1467 = vadd.f32 %v1463, %v1466
    %vm1468 = vweird.f32 %v1462
    %vm1469 = vweird.f32 %v1463
    %vm1470 = vmor %vm1468, %vm1469
    %v1471 = vsel %vm1470, %v1463, %v1467
    %v1472 = vand.u32 2147483647, %v1462
    %vm1473 = vcmp.eq.f32.partialorder %v1472, 8.507059e+37
    %v1474 = vand.u32 %v1462, 2147483648
    %v1475 = vor.u32 1.1754944e-38, %v1474
    %v1476 = vsel %vm1473, %v1475, %v1471
    %v1477 = vmul.f32 1.0, %v1476
    %v1478 = vtanh.pop %v1438
    %v1479 = vxor.u32 %v1439, 2147483648
    %v1480 = vmul.f32 %v1479, 1.442695
    %v1481 = vpow.pop %v1480
    %v1482 = vadd.f32 %v1481, 1.0
    %v1483 = vrcp.pop %v1482
    %v1484 = vmul.f32 %v1482, %v1483
    %v1485 = vsub.f32 1.0, %v1484
    %v1486 = vmul.f32 %v1483, %v1485
    %v1487 = vadd.f32 %v1483, %v1486
    %vm1488 = vweird.f32 %v1482
    %vm1489 = vweird.f32 %v1483
    %vm1490 = vmor %vm1488, %vm1489
    %v1491 = vsel %vm1490, %v1483, %v1487
    %v1492 = vand.u32 2147483647, %v1482
    %vm1493 = vcmp.eq.f32.partialorder %v1492, 8.507059e+37
    %v1494 = vand.u32 %v1482, 2147483648
    %v1495 = vor.u32 1.1754944e-38, %v1494
    %v1496 = vsel %vm1493, %v1495, %v1491
    %v1497 = vmul.f32 1.0, %v1496
    %v1498 = vmul.f32 %v1477, %v1346
    %v1499 = vmul.f32 %v1458, %v1478
    %v1500 = vadd.f32 %v1498, %v1499
    %v1501 = vtanh.pop %v1500
    %v1502 = vmul.f32 %v1497, %v1501
    %v1504 = vperm.slane %v269, 0
    %v1506 = vmul.f32 %v1502, %v1504
    %1507 = vadd.xlane.f32.xlu0 %v1506
    %v1508 = vpop.xlane.xlu0 %1507
    %v1510 = vperm.slane %v270, 0
    %v1512 = vadd.f32 %v1508, %v1510
    %vm1513 = vcmask 7168
    %1514 = vst.msk [vmem:[%s6] sm:$0xff] %vm1513, %v1512
    // Predicated region
    $region30: #{tpu_custom_call.1} parent=1 // pred_check
      _
    $region31: #{tpu_custom_call.1} parent=1 // pred_check_branch
      %1516 = sbr.rel (0) target = $region33
    $region32: #{tpu_custom_call.1} parent=1 // pred_region
      _
    $region33: #{tpu_custom_call.1} parent=1 // pred_fallthru
      _
    // Predicated region
    $region34: #{tpu_custom_call.1} parent=1 // pred_check
      _
    $region35: #{tpu_custom_call.1} parent=1 // pred_check_branch
      %1518 = sbr.rel (0) target = $region37
    $region36: #{tpu_custom_call.1} parent=1 // pred_region
      _
    $region37: #{tpu_custom_call.1} parent=1 // pred_fallthru
      _
    %1519 = vsyncpa [#allocation5], 1

</llo_original>
